<compile_context>
chip_gen: v5e
topology: v5e:2x2
jax: 0.10.0
libtpu: 0.0.40
codegen_flags: <defaults>
</compile_context>

<pallas_src>
import functools

import jax
import jax.numpy as jnp
from jax import lax
from jax.experimental import pallas as pl
from jax.experimental.pallas import tpu as pltpu


# ---------------------------------------------------------------------------
# Pallas kernel: stacked LSTM recurrence + final linear projection
# ---------------------------------------------------------------------------
def wind_lstm_kernel(gates0_ref, w_ih_ref, w_hh_ref, b_ref, w_out_ref,
                     b_out_ref, out_ref, seq_ref, gin_ref, *, num_layers):
    # gates0_ref: (T, bb, 4H)        layer-0 input gates = x*W_ih0 + b0 (precomputed)
    # w_ih_ref:   (max(L-1,1),H,4H)  input->gate weights for layers >= 1 (mm dtype)
    # w_hh_ref:   (L, H, 4H)         hidden->gate weights (mm dtype)
    # b_ref:      (max(L-1,1),1,4H)  combined biases (b_ih+b_hh) for layers >= 1 (f32)
    # w_out_ref:  (1, H)             linear weight (f32)
    # b_out_ref:  (1, 1)             linear bias (f32)
    # out_ref:    (T*bb, 1)          per-block output, rows ordered (t major, b minor)
    # seq_ref:    (T*bb, H)   scratch: current layer's hidden-state sequence (f32)
    # gin_ref:    (T*bb, 4H)  scratch: hoisted input-side gates for layers >= 1 (f32)
    T, bb, four_h = gates0_ref.shape
    H = four_h // 4
    mm_dtype = w_hh_ref.dtype

    # Per-lane activation constants, hoisted out of both loops.
    #   i/f/o lanes: sigmoid(z) = 0.5*tanh(0.5*z) + 0.5   g lanes: tanh(z)
    lane = lax.broadcasted_iota(jnp.int32, (1, 4 * H), 1)
    is_g = (lane >= 2 * H) & (lane < 3 * H)
    pre = jnp.where(is_g, jnp.float32(1.0), jnp.float32(0.5))       # tanh pre-scale
    post_add = jnp.where(is_g, jnp.float32(0.0), jnp.float32(0.5))  # post-mul == pre

    for layer in range(num_layers):
        if layer == 0:
            # Precomputed layer-0 gates: read directly, no VMEM copy.
            def load_gin(t):
                return gates0_ref[t]                                 # (bb, 4H)
        else:
            # Hoisted input projection (+ bias) for the whole sequence: one
            # well-shaped (T*bb, H) @ (H, 4H) matmul, off the serial path.
            prev = seq_ref[...].astype(mm_dtype)                     # no reshape
            gin_ref[...] = (
                jnp.dot(prev, w_ih_ref[layer - 1],
                        preferred_element_type=jnp.float32)
                + b_ref[layer - 1])                                  # bias folded

            def load_gin(t):
                return gin_ref[pl.ds(t * bb, bb), :]                 # (bb, 4H)

        w_hh = w_hh_ref[layer]                       # (H, 4H), already mm dtype

        h = jnp.zeros((bb, H), jnp.float32)
        c = jnp.zeros((bb, H), jnp.float32)
        # Fully-unrolled timestep recurrence (T static & small): only h @ W_hh
        # + gate math remain on the dependent chain.  For much larger bb*T,
        # switch to lax.fori_loop(..., unroll=True) with pl.ds/pl.multiple_of
        # indexing to bound vreg live ranges.
        for t in range(T):
            gates = load_gin(t) + jnp.dot(h.astype(mm_dtype), w_hh,
                                          preferred_element_type=jnp.float32)
            # Single EUP push over the full gates tile; gate math stays f32.
            act = jnp.tanh(gates * pre) * pre + post_add
            i_g = act[:, 0 * H:1 * H]                # PyTorch gate order i,f,g,o
            f_g = act[:, 1 * H:2 * H]
            g_g = act[:, 2 * H:3 * H]
            o_g = act[:, 3 * H:4 * H]
            c = f_g * c + i_g * g_g
            h = o_g * jnp.tanh(c)
            seq_ref[pl.ds(t * bb, bb), :] = h        # next layer's input (static idx)

    # Final Linear (H -> 1): VPU multiply + lane reduction (no N=1 MXU matmul).
    w_row = w_out_ref[...]                                           # (1, H)
    y = jnp.sum(seq_ref[...] * w_row, axis=-1, keepdims=True)        # (T*bb, 1)
    out_ref[...] = y + b_out_ref[...]


# ---------------------------------------------------------------------------
# Parameter init (matches nn.LSTM / nn.Linear shapes; deterministic)
# ---------------------------------------------------------------------------
def init_params(key, hidden_size, num_layers):
    H = hidden_size
    k = 1.0 / jnp.sqrt(jnp.float32(H))
    params = {}
    keys = jax.random.split(key, 4 * num_layers + 2)
    idx = 0
    for l in range(num_layers):
        in_size = 1 if l == 0 else H
        params[f"weight_ih_l{l}"] = jax.random.uniform(
            keys[idx], (4 * H, in_size), jnp.float32, -k, k); idx += 1
        params[f"weight_hh_l{l}"] = jax.random.uniform(
            keys[idx], (4 * H, H), jnp.float32, -k, k); idx += 1
        params[f"bias_ih_l{l}"] = jax.random.uniform(
            keys[idx], (4 * H,), jnp.float32, -k, k); idx += 1
        params[f"bias_hh_l{l}"] = jax.random.uniform(
            keys[idx], (4 * H,), jnp.float32, -k, k); idx += 1
    params["linear_w"] = jax.random.uniform(
        keys[idx], (1, H), jnp.float32, -k, k); idx += 1
    params["linear_b"] = jax.random.uniform(
        keys[idx], (1,), jnp.float32, -k, k)
    return params


def pack_params(params, hidden_size, num_layers, mm_dtype):
    H = hidden_size
    # Layer 0 (scalar input): keep only the (4H,) weight column + combined bias;
    # its input projection is a broadcast multiply done in the wrapper (f32).
    w_ih0_row = params["weight_ih_l0"][:, 0]                       # (4H,)
    bias0 = params["bias_ih_l0"] + params["bias_hh_l0"]            # (4H,)

    # MXU operands pre-cast so weights arrive in VMEM already in mm_dtype.
    w_hh = jnp.stack(
        [params[f"weight_hh_l{l}"].T for l in range(num_layers)]
    ).astype(mm_dtype)                                             # (L, H, 4H)
    if num_layers > 1:
        w_ih_up = jnp.stack(
            [params[f"weight_ih_l{l}"].T for l in range(1, num_layers)]
        ).astype(mm_dtype)                                         # (L-1, H, 4H)
        b_up = jnp.stack(
            [(params[f"bias_ih_l{l}"] + params[f"bias_hh_l{l}"]).reshape(1, 4 * H)
             for l in range(1, num_layers)])                       # (L-1, 1, 4H) f32
    else:  # dummies, never read when num_layers == 1
        w_ih_up = jnp.zeros((1, H, 4 * H), mm_dtype)
        b_up = jnp.zeros((1, 1, 4 * H), jnp.float32)

    w_out = params["linear_w"]                                     # (1, H) f32
    b_out = params["linear_b"].reshape(1, 1)                       # (1, 1) f32
    return w_ih_up, w_hh, b_up, w_ih0_row, bias0, w_out, b_out


def _pick_batch_block(B):
    """Generation-aware batch block.

    The grid is a sequential loop on one TensorCore and the kernel is
    latency-bound on the serial T*L recurrence, so fewer / wider blocks are
    strictly better: bb = B (grid=(1,)) on single-TC chips (v5e/v6e), bb = B/2
    (grid=(2,), one block per TensorCore via "parallel") on v7x, keeping bb a
    multiple of 8 whenever the batch is split.
    """
    ncores = 1
    try:
        kind = jax.devices()[0].device_kind.lower()
        if "v7" in kind:                      # 2 TensorCores per chip
            ncores = 2
    except Exception:
        pass
    if ncores > 1 and B % ncores == 0 and (B // ncores) % 8 == 0:
        return B // ncores
    return B


# ---------------------------------------------------------------------------
# Wrapper: batch-first (B, T, 1) in, (B, T, 1) out — same as the nn.Module
# ---------------------------------------------------------------------------
def wind_model_pallas(x, params, hidden_size, num_layers, *,
                      mm_dtype=jnp.bfloat16, batch_block=None):
    B, T, _ = x.shape
    H = hidden_size
    (w_ih_up, w_hh, b_up, w_ih0_row, bias0, w_out, b_out) = pack_params(
        params, H, num_layers, mm_dtype)

    # Layer-0 input projection precomputed in XLA: scalar input * weight row
    # + combined bias (pure broadcast; no padded weight, no per-step matmul).
    x_tm = jnp.transpose(x[:, :, 0], (1, 0))                       # (T, B)
    gates0 = (x_tm[:, :, None] * w_ih0_row[None, None, :]
              + bias0[None, None, :]).astype(jnp.float32)          # (T, B, 4H)

    bb = _pick_batch_block(B) if batch_block is None else batch_block
    assert B % bb == 0, (B, bb)
    nb = B // bb

    kernel = functools.partial(wind_lstm_kernel, num_layers=num_layers)

    def full_spec(shape):
        return pl.BlockSpec(shape, lambda i: (0,) * len(shape))

    # NOTE: resident footprint here is < 200 KiB; for much larger T/B/H/L, tile
    # over T with a BlockSpec / emit_pipeline and stream per-layer weights
    # instead of keeping everything VMEM-resident (v7x has 64 MiB physical /
    # 32 MiB scoped default).
    out_flat = pl.pallas_call(
        kernel,
        out_shape=jax.ShapeDtypeStruct((nb * T * bb, 1), jnp.float32),
        grid_spec=pltpu.PrefetchScalarGridSpec(
            num_scalar_prefetch=0,
            grid=(nb,),
            in_specs=[
                pl.BlockSpec((T, bb, 4 * H), lambda i: (0, i, 0)),  # gates0
                full_spec(w_ih_up.shape),                           # W_ih (layers>=1)
                full_spec(w_hh.shape),                              # W_hh (all layers)
                full_spec(b_up.shape),                              # biases (layers>=1)
                full_spec(w_out.shape),                             # (1, H)
                full_spec(b_out.shape),                             # (1, 1)
            ],
            out_specs=pl.BlockSpec((T * bb, 1), lambda i: (i, 0)),
            scratch_shapes=[
                pltpu.VMEM((T * bb, H), jnp.float32),       # hidden-state sequence
                pltpu.VMEM((T * bb, 4 * H), jnp.float32),   # hoisted input gates
            ],
        ),
        # Batch blocks are independent -> "parallel" lets v7x's two TensorCores
        # split the grid; harmless on single-core v5e/v6e (grid is (1,) there).
        compiler_params=pltpu.CompilerParams(
            dimension_semantics=("parallel",)),
    )(gates0, w_ih_up, w_hh, b_up, w_out, b_out)

    # Block i, row (t*bb + b_local) -> batch i*bb + b_local, time t.
    out = out_flat.reshape(nb, T, bb).transpose(0, 2, 1).reshape(B, T)
    return out[:, :, None]                                          # (B, T, 1)


# ---------------------------------------------------------------------------
# Pure-JAX reference (mirrors PyTorch nn.LSTM + nn.Linear semantics)
# ---------------------------------------------------------------------------
def wind_model_reference(x, params, hidden_size, num_layers):
    B, T, _ = x.shape
    H = hidden_size
    out = x
    for l in range(num_layers):
        w_ih = params[f"weight_ih_l{l}"]
        w_hh = params[f"weight_hh_l{l}"]
        bias = params[f"bias_ih_l{l}"] + params[f"bias_hh_l{l}"]

        def step(carry, x_t, w_ih=w_ih, w_hh=w_hh, bias=bias):
            h, c = carry
            gates = x_t @ w_ih.T + h @ w_hh.T + bias
            i_g, f_g, g_g, o_g = jnp.split(gates, 4, axis=-1)
            i_g = jax.nn.sigmoid(i_g)
            f_g = jax.nn.sigmoid(f_g)
            g_g = jnp.tanh(g_g)
            o_g = jax.nn.sigmoid(o_g)
            c_new = f_g * c + i_g * g_g
            h_new = o_g * jnp.tanh(c_new)
            return (h_new, c_new), h_new

        h0 = jnp.zeros((B, H), jnp.float32)
        c0 = jnp.zeros((B, H), jnp.float32)
        xs = jnp.transpose(out, (1, 0, 2))                  # (T, B, in)
        _, hs = lax.scan(step, (h0, c0), xs)
        out = jnp.transpose(hs, (1, 0, 2))                  # (B, T, H)
    return out @ params["linear_w"].T + params["linear_b"]


if __name__ == "__main__":
    HIDDEN_SIZE = 32      # -> gate width 4H = 128 (one full lane vector)
    NUM_LAYERS = 2
    BATCH = 16
    SEQ = 8

    key = jax.random.PRNGKey(0)
    k_x, k_p = jax.random.split(key)
    x = jax.random.normal(k_x, (BATCH, SEQ, 1), jnp.float32)
    params = init_params(k_p, HIDDEN_SIZE, NUM_LAYERS)

    y_ref = wind_model_reference(x, params, HIDDEN_SIZE, NUM_LAYERS)

    # Default path: bf16 MXU operands, f32 accumulation + f32 gate math,
    # generation-aware batch block (bb=B on v5e/v6e, bb=B/2 on v7x).
    y = wind_model_pallas(x, params, HIDDEN_SIZE, NUM_LAYERS)
    y = jax.block_until_ready(y)
    assert y.shape == (BATCH, SEQ, 1), y.shape
    assert jnp.allclose(y, y_ref, atol=2e-2, rtol=2e-2), (
        "bf16 mismatch vs reference: max err "
        f"{float(jnp.max(jnp.abs(y - y_ref)))}")

    # f32 MXU operands: tight parity with the reference.
    y32 = wind_model_pallas(x, params, HIDDEN_SIZE, NUM_LAYERS,
                            mm_dtype=jnp.float32)
    y32 = jax.block_until_ready(y32)
    assert jnp.allclose(y32, y_ref, atol=1e-3, rtol=1e-3), (
        "f32 mismatch vs reference: max err "
        f"{float(jnp.max(jnp.abs(y32 - y_ref)))}")

    # Explicit 2-block grid (exercises the multi-block / v7x-style path and the
    # wrapper's block reassembly regardless of which chip this runs on).
    y2 = wind_model_pallas(x, params, HIDDEN_SIZE, NUM_LAYERS, batch_block=8)
    y2 = jax.block_until_ready(y2)
    assert jnp.allclose(y2, y_ref, atol=2e-2, rtol=2e-2), (
        "2-block grid mismatch vs reference: max err "
        f"{float(jnp.max(jnp.abs(y2 - y_ref)))}")

    print("KERNEL_OK")
</pallas_src>

<mosaic_0001>
module attributes {stable_mosaic.version = 11 : i64} {
  func.func @wind_lstm_kernel(%arg0: i32, %arg1: memref<8x16x128xf32, #tpu.memory_space<vmem>>, %arg2: memref<1x32x128xbf16, #tpu.memory_space<vmem>>, %arg3: memref<2x32x128xbf16, #tpu.memory_space<vmem>>, %arg4: memref<1x1x128xf32, #tpu.memory_space<vmem>>, %arg5: memref<1x32xf32, #tpu.memory_space<vmem>>, %arg6: memref<1x1xf32, #tpu.memory_space<vmem>>, %arg7: memref<128x1xf32, #tpu.memory_space<vmem>>, %arg8: memref<128x32xf32, #tpu.memory_space<vmem>>, %arg9: memref<128x128xf32, #tpu.memory_space<vmem>>) attributes {dimension_semantics = [#tpu.dimension_semantics<parallel>], iteration_bounds = array<i64: 1>, scalar_prefetch = 0 : i64, scratch_operands = 2 : i64, tpu.core_type = #tpu.core_type<tc>, window_params = [{transform_indices = @transform_0, window_bounds = array<i64: 8, 16, 128>}, {pipeline_mode = #tpu.pipeline_mode<synchronous>, transform_indices = @transform_1, window_bounds = array<i64: 1, 32, 128>}, {pipeline_mode = #tpu.pipeline_mode<synchronous>, transform_indices = @transform_2, window_bounds = array<i64: 2, 32, 128>}, {pipeline_mode = #tpu.pipeline_mode<synchronous>, transform_indices = @transform_3, window_bounds = array<i64: 1, 1, 128>}, {pipeline_mode = #tpu.pipeline_mode<synchronous>, transform_indices = @transform_4, window_bounds = array<i64: 1, 32>}, {pipeline_mode = #tpu.pipeline_mode<synchronous>, transform_indices = @transform_5, window_bounds = array<i64: 1, 1>}, {transform_indices = @transform_6, window_bounds = array<i64: 128, 1>}]} {
    %0 = tpu.iota {dimensions = array<i32: 1>} : vector<1x128xi32>
    %c64_i32 = arith.constant 64 : i32
    %1 = vector.broadcast %c64_i32 : i32 to vector<1x128xi32>
    %2 = arith.cmpi sge, %0, %1 : vector<1x128xi32>
    %c96_i32 = arith.constant 96 : i32
    %3 = vector.broadcast %c96_i32 : i32 to vector<1x128xi32>
    %4 = arith.cmpi slt, %0, %3 : vector<1x128xi32>
    %5 = arith.andi %2, %4 : vector<1x128xi1>
    %cst = arith.constant 1.000000e+00 : f32
    %cst_0 = arith.constant 5.000000e-01 : f32
    %6 = vector.broadcast %cst : f32 to vector<1x128xf32>
    %7 = vector.broadcast %cst_0 : f32 to vector<1x128xf32>
    %8 = arith.select %5, %6, %7 : vector<1x128xi1>, vector<1x128xf32>
    %cst_1 = arith.constant 0.000000e+00 : f32
    %cst_2 = arith.constant 5.000000e-01 : f32
    %9 = vector.broadcast %cst_1 : f32 to vector<1x128xf32>
    %10 = vector.broadcast %cst_2 : f32 to vector<1x128xf32>
    %11 = arith.select %5, %9, %10 : vector<1x128xi1>, vector<1x128xf32>
    %c0 = arith.constant 0 : index
    %c0_3 = arith.constant 0 : index
    %c0_4 = arith.constant 0 : index
    %12 = vector.load %arg3[%c0, %c0_3, %c0_4] : memref<2x32x128xbf16, #tpu.memory_space<vmem>>, vector<1x32x128xbf16>
    %13 = vector.shape_cast %12 : vector<1x32x128xbf16> to vector<32x128xbf16>
    %cst_5 = arith.constant 0.000000e+00 : f32
    %14 = vector.broadcast %cst_5 : f32 to vector<16x32xf32>
    %cst_6 = arith.constant 0.000000e+00 : f32
    %15 = vector.broadcast %cst_6 : f32 to vector<16x32xf32>
    %c0_7 = arith.constant 0 : index
    %c0_8 = arith.constant 0 : index
    %c0_9 = arith.constant 0 : index
    %16 = vector.load %arg1[%c0_7, %c0_8, %c0_9] : memref<8x16x128xf32, #tpu.memory_space<vmem>>, vector<1x16x128xf32>
    %17 = vector.shape_cast %16 : vector<1x16x128xf32> to vector<16x128xf32>
    %18 = arith.truncf %14 : vector<16x32xf32> to vector<16x32xbf16>
    %cst_10 = arith.constant dense<0.000000e+00> : vector<16x128xf32>
    %19 = tpu.matmul %18, %13, %cst_10 {dimension_numbers = #tpu.dot_dimension_numbers<[1], [0], [0], [1], [0, 0, 1, 1], [], []>} : vector<16x32xbf16>, vector<32x128xbf16>, vector<16x128xf32> -> vector<16x128xf32>
    %20 = arith.addf %17, %19 : vector<16x128xf32>
    %21 = vector.broadcast %8 : vector<1x128xf32> to vector<16x128xf32>
    %22 = arith.mulf %20, %21 : vector<16x128xf32>
    %23 = math.tanh %22 : vector<16x128xf32>
    %24 = vector.broadcast %8 : vector<1x128xf32> to vector<16x128xf32>
    %25 = arith.mulf %23, %24 : vector<16x128xf32>
    %26 = vector.broadcast %11 : vector<1x128xf32> to vector<16x128xf32>
    %27 = arith.addf %25, %26 : vector<16x128xf32>
    %28 = vector.extract_strided_slice %27 {offsets = [0, 0], sizes = [16, 32], strides = [1, 1]} : vector<16x128xf32> to vector<16x32xf32>
    %29 = vector.extract_strided_slice %27 {offsets = [0, 32], sizes = [16, 32], strides = [1, 1]} : vector<16x128xf32> to vector<16x32xf32>
    %30 = vector.extract_strided_slice %27 {offsets = [0, 64], sizes = [16, 32], strides = [1, 1]} : vector<16x128xf32> to vector<16x32xf32>
    %31 = vector.extract_strided_slice %27 {offsets = [0, 96], sizes = [16, 32], strides = [1, 1]} : vector<16x128xf32> to vector<16x32xf32>
    %32 = arith.mulf %29, %15 : vector<16x32xf32>
    %33 = arith.mulf %28, %30 : vector<16x32xf32>
    %34 = arith.addf %32, %33 : vector<16x32xf32>
    %35 = math.tanh %34 : vector<16x32xf32>
    %36 = arith.mulf %31, %35 : vector<16x32xf32>
    %c0_11 = arith.constant 0 : index
    %c0_12 = arith.constant 0 : index
    %37 = vector.load %arg8[%c0_11, %c0_12] : memref<128x32xf32, #tpu.memory_space<vmem>>, vector<16x32xf32>
    tpu.vector_store %arg8[%c0_11, %c0_12], %36 {strides = array<i32>} : memref<128x32xf32, #tpu.memory_space<vmem>>, vector<16x32xf32>,
    %c1 = arith.constant 1 : index
    %c0_13 = arith.constant 0 : index
    %c0_14 = arith.constant 0 : index
    %38 = vector.load %arg1[%c1, %c0_13, %c0_14] : memref<8x16x128xf32, #tpu.memory_space<vmem>>, vector<1x16x128xf32>
    %39 = vector.shape_cast %38 : vector<1x16x128xf32> to vector<16x128xf32>
    %40 = arith.truncf %36 : vector<16x32xf32> to vector<16x32xbf16>
    %cst_15 = arith.constant dense<0.000000e+00> : vector<16x128xf32>
    %41 = tpu.matmul %40, %13, %cst_15 {dimension_numbers = #tpu.dot_dimension_numbers<[1], [0], [0], [1], [0, 0, 1, 1], [], []>} : vector<16x32xbf16>, vector<32x128xbf16>, vector<16x128xf32> -> vector<16x128xf32>
    %42 = arith.addf %39, %41 : vector<16x128xf32>
    %43 = vector.broadcast %8 : vector<1x128xf32> to vector<16x128xf32>
    %44 = arith.mulf %42, %43 : vector<16x128xf32>
    %45 = math.tanh %44 : vector<16x128xf32>
    %46 = vector.broadcast %8 : vector<1x128xf32> to vector<16x128xf32>
    %47 = arith.mulf %45, %46 : vector<16x128xf32>
    %48 = vector.broadcast %11 : vector<1x128xf32> to vector<16x128xf32>
    %49 = arith.addf %47, %48 : vector<16x128xf32>
    %50 = vector.extract_strided_slice %49 {offsets = [0, 0], sizes = [16, 32], strides = [1, 1]} : vector<16x128xf32> to vector<16x32xf32>
    %51 = vector.extract_strided_slice %49 {offsets = [0, 32], sizes = [16, 32], strides = [1, 1]} : vector<16x128xf32> to vector<16x32xf32>
    %52 = vector.extract_strided_slice %49 {offsets = [0, 64], sizes = [16, 32], strides = [1, 1]} : vector<16x128xf32> to vector<16x32xf32>
    %53 = vector.extract_strided_slice %49 {offsets = [0, 96], sizes = [16, 32], strides = [1, 1]} : vector<16x128xf32> to vector<16x32xf32>
    %54 = arith.mulf %51, %34 : vector<16x32xf32>
    %55 = arith.mulf %50, %52 : vector<16x32xf32>
    %56 = arith.addf %54, %55 : vector<16x32xf32>
    %57 = math.tanh %56 : vector<16x32xf32>
    %58 = arith.mulf %53, %57 : vector<16x32xf32>
    %c16 = arith.constant 16 : index
    %c0_16 = arith.constant 0 : index
    %59 = vector.load %arg8[%c16, %c0_16] : memref<128x32xf32, #tpu.memory_space<vmem>>, vector<16x32xf32>
    tpu.vector_store %arg8[%c16, %c0_16], %58 {strides = array<i32>} : memref<128x32xf32, #tpu.memory_space<vmem>>, vector<16x32xf32>,
    %c2 = arith.constant 2 : index
    %c0_17 = arith.constant 0 : index
    %c0_18 = arith.constant 0 : index
    %60 = vector.load %arg1[%c2, %c0_17, %c0_18] : memref<8x16x128xf32, #tpu.memory_space<vmem>>, vector<1x16x128xf32>
    %61 = vector.shape_cast %60 : vector<1x16x128xf32> to vector<16x128xf32>
    %62 = arith.truncf %58 : vector<16x32xf32> to vector<16x32xbf16>
    %cst_19 = arith.constant dense<0.000000e+00> : vector<16x128xf32>
    %63 = tpu.matmul %62, %13, %cst_19 {dimension_numbers = #tpu.dot_dimension_numbers<[1], [0], [0], [1], [0, 0, 1, 1], [], []>} : vector<16x32xbf16>, vector<32x128xbf16>, vector<16x128xf32> -> vector<16x128xf32>
    %64 = arith.addf %61, %63 : vector<16x128xf32>
    %65 = vector.broadcast %8 : vector<1x128xf32> to vector<16x128xf32>
    %66 = arith.mulf %64, %65 : vector<16x128xf32>
    %67 = math.tanh %66 : vector<16x128xf32>
    %68 = vector.broadcast %8 : vector<1x128xf32> to vector<16x128xf32>
    %69 = arith.mulf %67, %68 : vector<16x128xf32>
    %70 = vector.broadcast %11 : vector<1x128xf32> to vector<16x128xf32>
    %71 = arith.addf %69, %70 : vector<16x128xf32>
    %72 = vector.extract_strided_slice %71 {offsets = [0, 0], sizes = [16, 32], strides = [1, 1]} : vector<16x128xf32> to vector<16x32xf32>
    %73 = vector.extract_strided_slice %71 {offsets = [0, 32], sizes = [16, 32], strides = [1, 1]} : vector<16x128xf32> to vector<16x32xf32>
    %74 = vector.extract_strided_slice %71 {offsets = [0, 64], sizes = [16, 32], strides = [1, 1]} : vector<16x128xf32> to vector<16x32xf32>
    %75 = vector.extract_strided_slice %71 {offsets = [0, 96], sizes = [16, 32], strides = [1, 1]} : vector<16x128xf32> to vector<16x32xf32>
    %76 = arith.mulf %73, %56 : vector<16x32xf32>
    %77 = arith.mulf %72, %74 : vector<16x32xf32>
    %78 = arith.addf %76, %77 : vector<16x32xf32>
    %79 = math.tanh %78 : vector<16x32xf32>
    %80 = arith.mulf %75, %79 : vector<16x32xf32>
    %c32 = arith.constant 32 : index
    %c0_20 = arith.constant 0 : index
    %81 = vector.load %arg8[%c32, %c0_20] : memref<128x32xf32, #tpu.memory_space<vmem>>, vector<16x32xf32>
    tpu.vector_store %arg8[%c32, %c0_20], %80 {strides = array<i32>} : memref<128x32xf32, #tpu.memory_space<vmem>>, vector<16x32xf32>,
    %c3 = arith.constant 3 : index
    %c0_21 = arith.constant 0 : index
    %c0_22 = arith.constant 0 : index
    %82 = vector.load %arg1[%c3, %c0_21, %c0_22] : memref<8x16x128xf32, #tpu.memory_space<vmem>>, vector<1x16x128xf32>
    %83 = vector.shape_cast %82 : vector<1x16x128xf32> to vector<16x128xf32>
    %84 = arith.truncf %80 : vector<16x32xf32> to vector<16x32xbf16>
    %cst_23 = arith.constant dense<0.000000e+00> : vector<16x128xf32>
    %85 = tpu.matmul %84, %13, %cst_23 {dimension_numbers = #tpu.dot_dimension_numbers<[1], [0], [0], [1], [0, 0, 1, 1], [], []>} : vector<16x32xbf16>, vector<32x128xbf16>, vector<16x128xf32> -> vector<16x128xf32>
    %86 = arith.addf %83, %85 : vector<16x128xf32>
    %87 = vector.broadcast %8 : vector<1x128xf32> to vector<16x128xf32>
    %88 = arith.mulf %86, %87 : vector<16x128xf32>
    %89 = math.tanh %88 : vector<16x128xf32>
    %90 = vector.broadcast %8 : vector<1x128xf32> to vector<16x128xf32>
    %91 = arith.mulf %89, %90 : vector<16x128xf32>
    %92 = vector.broadcast %11 : vector<1x128xf32> to vector<16x128xf32>
    %93 = arith.addf %91, %92 : vector<16x128xf32>
    %94 = vector.extract_strided_slice %93 {offsets = [0, 0], sizes = [16, 32], strides = [1, 1]} : vector<16x128xf32> to vector<16x32xf32>
    %95 = vector.extract_strided_slice %93 {offsets = [0, 32], sizes = [16, 32], strides = [1, 1]} : vector<16x128xf32> to vector<16x32xf32>
    %96 = vector.extract_strided_slice %93 {offsets = [0, 64], sizes = [16, 32], strides = [1, 1]} : vector<16x128xf32> to vector<16x32xf32>
    %97 = vector.extract_strided_slice %93 {offsets = [0, 96], sizes = [16, 32], strides = [1, 1]} : vector<16x128xf32> to vector<16x32xf32>
    %98 = arith.mulf %95, %78 : vector<16x32xf32>
    %99 = arith.mulf %94, %96 : vector<16x32xf32>
    %100 = arith.addf %98, %99 : vector<16x32xf32>
    %101 = math.tanh %100 : vector<16x32xf32>
    %102 = arith.mulf %97, %101 : vector<16x32xf32>
    %c48 = arith.constant 48 : index
    %c0_24 = arith.constant 0 : index
    %103 = vector.load %arg8[%c48, %c0_24] : memref<128x32xf32, #tpu.memory_space<vmem>>, vector<16x32xf32>
    tpu.vector_store %arg8[%c48, %c0_24], %102 {strides = array<i32>} : memref<128x32xf32, #tpu.memory_space<vmem>>, vector<16x32xf32>,
    %c4 = arith.constant 4 : index
    %c0_25 = arith.constant 0 : index
    %c0_26 = arith.constant 0 : index
    %104 = vector.load %arg1[%c4, %c0_25, %c0_26] : memref<8x16x128xf32, #tpu.memory_space<vmem>>, vector<1x16x128xf32>
    %105 = vector.shape_cast %104 : vector<1x16x128xf32> to vector<16x128xf32>
    %106 = arith.truncf %102 : vector<16x32xf32> to vector<16x32xbf16>
    %cst_27 = arith.constant dense<0.000000e+00> : vector<16x128xf32>
    %107 = tpu.matmul %106, %13, %cst_27 {dimension_numbers = #tpu.dot_dimension_numbers<[1], [0], [0], [1], [0, 0, 1, 1], [], []>} : vector<16x32xbf16>, vector<32x128xbf16>, vector<16x128xf32> -> vector<16x128xf32>
    %108 = arith.addf %105, %107 : vector<16x128xf32>
    %109 = vector.broadcast %8 : vector<1x128xf32> to vector<16x128xf32>
    %110 = arith.mulf %108, %109 : vector<16x128xf32>
    %111 = math.tanh %110 : vector<16x128xf32>
    %112 = vector.broadcast %8 : vector<1x128xf32> to vector<16x128xf32>
    %113 = arith.mulf %111, %112 : vector<16x128xf32>
    %114 = vector.broadcast %11 : vector<1x128xf32> to vector<16x128xf32>
    %115 = arith.addf %113, %114 : vector<16x128xf32>
    %116 = vector.extract_strided_slice %115 {offsets = [0, 0], sizes = [16, 32], strides = [1, 1]} : vector<16x128xf32> to vector<16x32xf32>
    %117 = vector.extract_strided_slice %115 {offsets = [0, 32], sizes = [16, 32], strides = [1, 1]} : vector<16x128xf32> to vector<16x32xf32>
    %118 = vector.extract_strided_slice %115 {offsets = [0, 64], sizes = [16, 32], strides = [1, 1]} : vector<16x128xf32> to vector<16x32xf32>
    %119 = vector.extract_strided_slice %115 {offsets = [0, 96], sizes = [16, 32], strides = [1, 1]} : vector<16x128xf32> to vector<16x32xf32>
    %120 = arith.mulf %117, %100 : vector<16x32xf32>
    %121 = arith.mulf %116, %118 : vector<16x32xf32>
    %122 = arith.addf %120, %121 : vector<16x32xf32>
    %123 = math.tanh %122 : vector<16x32xf32>
    %124 = arith.mulf %119, %123 : vector<16x32xf32>
    %c64 = arith.constant 64 : index
    %c0_28 = arith.constant 0 : index
    %125 = vector.load %arg8[%c64, %c0_28] : memref<128x32xf32, #tpu.memory_space<vmem>>, vector<16x32xf32>
    tpu.vector_store %arg8[%c64, %c0_28], %124 {strides = array<i32>} : memref<128x32xf32, #tpu.memory_space<vmem>>, vector<16x32xf32>,
    %c5 = arith.constant 5 : index
    %c0_29 = arith.constant 0 : index
    %c0_30 = arith.constant 0 : index
    %126 = vector.load %arg1[%c5, %c0_29, %c0_30] : memref<8x16x128xf32, #tpu.memory_space<vmem>>, vector<1x16x128xf32>
    %127 = vector.shape_cast %126 : vector<1x16x128xf32> to vector<16x128xf32>
    %128 = arith.truncf %124 : vector<16x32xf32> to vector<16x32xbf16>
    %cst_31 = arith.constant dense<0.000000e+00> : vector<16x128xf32>
    %129 = tpu.matmul %128, %13, %cst_31 {dimension_numbers = #tpu.dot_dimension_numbers<[1], [0], [0], [1], [0, 0, 1, 1], [], []>} : vector<16x32xbf16>, vector<32x128xbf16>, vector<16x128xf32> -> vector<16x128xf32>
    %130 = arith.addf %127, %129 : vector<16x128xf32>
    %131 = vector.broadcast %8 : vector<1x128xf32> to vector<16x128xf32>
    %132 = arith.mulf %130, %131 : vector<16x128xf32>
    %133 = math.tanh %132 : vector<16x128xf32>
    %134 = vector.broadcast %8 : vector<1x128xf32> to vector<16x128xf32>
    %135 = arith.mulf %133, %134 : vector<16x128xf32>
    %136 = vector.broadcast %11 : vector<1x128xf32> to vector<16x128xf32>
    %137 = arith.addf %135, %136 : vector<16x128xf32>
    %138 = vector.extract_strided_slice %137 {offsets = [0, 0], sizes = [16, 32], strides = [1, 1]} : vector<16x128xf32> to vector<16x32xf32>
    %139 = vector.extract_strided_slice %137 {offsets = [0, 32], sizes = [16, 32], strides = [1, 1]} : vector<16x128xf32> to vector<16x32xf32>
    %140 = vector.extract_strided_slice %137 {offsets = [0, 64], sizes = [16, 32], strides = [1, 1]} : vector<16x128xf32> to vector<16x32xf32>
    %141 = vector.extract_strided_slice %137 {offsets = [0, 96], sizes = [16, 32], strides = [1, 1]} : vector<16x128xf32> to vector<16x32xf32>
    %142 = arith.mulf %139, %122 : vector<16x32xf32>
    %143 = arith.mulf %138, %140 : vector<16x32xf32>
    %144 = arith.addf %142, %143 : vector<16x32xf32>
    %145 = math.tanh %144 : vector<16x32xf32>
    %146 = arith.mulf %141, %145 : vector<16x32xf32>
    %c80 = arith.constant 80 : index
    %c0_32 = arith.constant 0 : index
    %147 = vector.load %arg8[%c80, %c0_32] : memref<128x32xf32, #tpu.memory_space<vmem>>, vector<16x32xf32>
    tpu.vector_store %arg8[%c80, %c0_32], %146 {strides = array<i32>} : memref<128x32xf32, #tpu.memory_space<vmem>>, vector<16x32xf32>,
    %c6 = arith.constant 6 : index
    %c0_33 = arith.constant 0 : index
    %c0_34 = arith.constant 0 : index
    %148 = vector.load %arg1[%c6, %c0_33, %c0_34] : memref<8x16x128xf32, #tpu.memory_space<vmem>>, vector<1x16x128xf32>
    %149 = vector.shape_cast %148 : vector<1x16x128xf32> to vector<16x128xf32>
    %150 = arith.truncf %146 : vector<16x32xf32> to vector<16x32xbf16>
    %cst_35 = arith.constant dense<0.000000e+00> : vector<16x128xf32>
    %151 = tpu.matmul %150, %13, %cst_35 {dimension_numbers = #tpu.dot_dimension_numbers<[1], [0], [0], [1], [0, 0, 1, 1], [], []>} : vector<16x32xbf16>, vector<32x128xbf16>, vector<16x128xf32> -> vector<16x128xf32>
    %152 = arith.addf %149, %151 : vector<16x128xf32>
    %153 = vector.broadcast %8 : vector<1x128xf32> to vector<16x128xf32>
    %154 = arith.mulf %152, %153 : vector<16x128xf32>
    %155 = math.tanh %154 : vector<16x128xf32>
    %156 = vector.broadcast %8 : vector<1x128xf32> to vector<16x128xf32>
    %157 = arith.mulf %155, %156 : vector<16x128xf32>
    %158 = vector.broadcast %11 : vector<1x128xf32> to vector<16x128xf32>
    %159 = arith.addf %157, %158 : vector<16x128xf32>
    %160 = vector.extract_strided_slice %159 {offsets = [0, 0], sizes = [16, 32], strides = [1, 1]} : vector<16x128xf32> to vector<16x32xf32>
    %161 = vector.extract_strided_slice %159 {offsets = [0, 32], sizes = [16, 32], strides = [1, 1]} : vector<16x128xf32> to vector<16x32xf32>
    %162 = vector.extract_strided_slice %159 {offsets = [0, 64], sizes = [16, 32], strides = [1, 1]} : vector<16x128xf32> to vector<16x32xf32>
    %163 = vector.extract_strided_slice %159 {offsets = [0, 96], sizes = [16, 32], strides = [1, 1]} : vector<16x128xf32> to vector<16x32xf32>
    %164 = arith.mulf %161, %144 : vector<16x32xf32>
    %165 = arith.mulf %160, %162 : vector<16x32xf32>
    %166 = arith.addf %164, %165 : vector<16x32xf32>
    %167 = math.tanh %166 : vector<16x32xf32>
    %168 = arith.mulf %163, %167 : vector<16x32xf32>
    %c96 = arith.constant 96 : index
    %c0_36 = arith.constant 0 : index
    %169 = vector.load %arg8[%c96, %c0_36] : memref<128x32xf32, #tpu.memory_space<vmem>>, vector<16x32xf32>
    tpu.vector_store %arg8[%c96, %c0_36], %168 {strides = array<i32>} : memref<128x32xf32, #tpu.memory_space<vmem>>, vector<16x32xf32>,
    %c7 = arith.constant 7 : index
    %c0_37 = arith.constant 0 : index
    %c0_38 = arith.constant 0 : index
    %170 = vector.load %arg1[%c7, %c0_37, %c0_38] : memref<8x16x128xf32, #tpu.memory_space<vmem>>, vector<1x16x128xf32>
    %171 = vector.shape_cast %170 : vector<1x16x128xf32> to vector<16x128xf32>
    %172 = arith.truncf %168 : vector<16x32xf32> to vector<16x32xbf16>
    %cst_39 = arith.constant dense<0.000000e+00> : vector<16x128xf32>
    %173 = tpu.matmul %172, %13, %cst_39 {dimension_numbers = #tpu.dot_dimension_numbers<[1], [0], [0], [1], [0, 0, 1, 1], [], []>} : vector<16x32xbf16>, vector<32x128xbf16>, vector<16x128xf32> -> vector<16x128xf32>
    %174 = arith.addf %171, %173 : vector<16x128xf32>
    %175 = vector.broadcast %8 : vector<1x128xf32> to vector<16x128xf32>
    %176 = arith.mulf %174, %175 : vector<16x128xf32>
    %177 = math.tanh %176 : vector<16x128xf32>
    %178 = vector.broadcast %8 : vector<1x128xf32> to vector<16x128xf32>
    %179 = arith.mulf %177, %178 : vector<16x128xf32>
    %180 = vector.broadcast %11 : vector<1x128xf32> to vector<16x128xf32>
    %181 = arith.addf %179, %180 : vector<16x128xf32>
    %182 = vector.extract_strided_slice %181 {offsets = [0, 0], sizes = [16, 32], strides = [1, 1]} : vector<16x128xf32> to vector<16x32xf32>
    %183 = vector.extract_strided_slice %181 {offsets = [0, 32], sizes = [16, 32], strides = [1, 1]} : vector<16x128xf32> to vector<16x32xf32>
    %184 = vector.extract_strided_slice %181 {offsets = [0, 64], sizes = [16, 32], strides = [1, 1]} : vector<16x128xf32> to vector<16x32xf32>
    %185 = vector.extract_strided_slice %181 {offsets = [0, 96], sizes = [16, 32], strides = [1, 1]} : vector<16x128xf32> to vector<16x32xf32>
    %186 = arith.mulf %183, %166 : vector<16x32xf32>
    %187 = arith.mulf %182, %184 : vector<16x32xf32>
    %188 = arith.addf %186, %187 : vector<16x32xf32>
    %189 = math.tanh %188 : vector<16x32xf32>
    %190 = arith.mulf %185, %189 : vector<16x32xf32>
    %c112 = arith.constant 112 : index
    %c0_40 = arith.constant 0 : index
    %191 = vector.load %arg8[%c112, %c0_40] : memref<128x32xf32, #tpu.memory_space<vmem>>, vector<16x32xf32>
    tpu.vector_store %arg8[%c112, %c0_40], %190 {strides = array<i32>} : memref<128x32xf32, #tpu.memory_space<vmem>>, vector<16x32xf32>,
    %c0_41 = arith.constant 0 : index
    %c0_42 = arith.constant 0 : index
    %192 = vector.load %arg8[%c0_41, %c0_42] : memref<128x32xf32, #tpu.memory_space<vmem>>, vector<128x32xf32>
    %193 = arith.truncf %192 : vector<128x32xf32> to vector<128x32xbf16>
    %c0_43 = arith.constant 0 : index
    %c0_44 = arith.constant 0 : index
    %c0_45 = arith.constant 0 : index
    %194 = vector.load %arg2[%c0_43, %c0_44, %c0_45] : memref<1x32x128xbf16, #tpu.memory_space<vmem>>, vector<1x32x128xbf16>
    %195 = vector.shape_cast %194 : vector<1x32x128xbf16> to vector<32x128xbf16>
    %cst_46 = arith.constant dense<0.000000e+00> : vector<128x128xf32>
    %196 = tpu.matmul %193, %195, %cst_46 {dimension_numbers = #tpu.dot_dimension_numbers<[1], [0], [0], [1], [0, 0, 1, 1], [], []>} : vector<128x32xbf16>, vector<32x128xbf16>, vector<128x128xf32> -> vector<128x128xf32>
    %c0_47 = arith.constant 0 : index
    %c0_48 = arith.constant 0 : index
    %c0_49 = arith.constant 0 : index
    %197 = vector.load %arg4[%c0_47, %c0_48, %c0_49] : memref<1x1x128xf32, #tpu.memory_space<vmem>>, vector<1x1x128xf32>
    %198 = vector.shape_cast %197 : vector<1x1x128xf32> to vector<1x128xf32>
    %199 = vector.broadcast %198 : vector<1x128xf32> to vector<128x128xf32>
    %200 = arith.addf %196, %199 : vector<128x128xf32>
    %c0_50 = arith.constant 0 : index
    %c0_51 = arith.constant 0 : index
    %201 = vector.load %arg9[%c0_50, %c0_51] : memref<128x128xf32, #tpu.memory_space<vmem>>, vector<128x128xf32>
    tpu.vector_store %arg9[%c0_50, %c0_51], %200 {strides = array<i32>} : memref<128x128xf32, #tpu.memory_space<vmem>>, vector<128x128xf32>,
    %c1_52 = arith.constant 1 : index
    %c0_53 = arith.constant 0 : index
    %c0_54 = arith.constant 0 : index
    %202 = vector.load %arg3[%c1_52, %c0_53, %c0_54] : memref<2x32x128xbf16, #tpu.memory_space<vmem>>, vector<1x32x128xbf16>
    %203 = vector.shape_cast %202 : vector<1x32x128xbf16> to vector<32x128xbf16>
    %cst_55 = arith.constant 0.000000e+00 : f32
    %204 = vector.broadcast %cst_55 : f32 to vector<16x32xf32>
    %cst_56 = arith.constant 0.000000e+00 : f32
    %205 = vector.broadcast %cst_56 : f32 to vector<16x32xf32>
    %c0_57 = arith.constant 0 : index
    %c0_58 = arith.constant 0 : index
    %206 = vector.load %arg9[%c0_57, %c0_58] : memref<128x128xf32, #tpu.memory_space<vmem>>, vector<16x128xf32>
    %207 = arith.truncf %204 : vector<16x32xf32> to vector<16x32xbf16>
    %cst_59 = arith.constant dense<0.000000e+00> : vector<16x128xf32>
    %208 = tpu.matmul %207, %203, %cst_59 {dimension_numbers = #tpu.dot_dimension_numbers<[1], [0], [0], [1], [0, 0, 1, 1], [], []>} : vector<16x32xbf16>, vector<32x128xbf16>, vector<16x128xf32> -> vector<16x128xf32>
    %209 = arith.addf %206, %208 : vector<16x128xf32>
    %210 = vector.broadcast %8 : vector<1x128xf32> to vector<16x128xf32>
    %211 = arith.mulf %209, %210 : vector<16x128xf32>
    %212 = math.tanh %211 : vector<16x128xf32>
    %213 = vector.broadcast %8 : vector<1x128xf32> to vector<16x128xf32>
    %214 = arith.mulf %212, %213 : vector<16x128xf32>
    %215 = vector.broadcast %11 : vector<1x128xf32> to vector<16x128xf32>
    %216 = arith.addf %214, %215 : vector<16x128xf32>
    %217 = vector.extract_strided_slice %216 {offsets = [0, 0], sizes = [16, 32], strides = [1, 1]} : vector<16x128xf32> to vector<16x32xf32>
    %218 = vector.extract_strided_slice %216 {offsets = [0, 32], sizes = [16, 32], strides = [1, 1]} : vector<16x128xf32> to vector<16x32xf32>
    %219 = vector.extract_strided_slice %216 {offsets = [0, 64], sizes = [16, 32], strides = [1, 1]} : vector<16x128xf32> to vector<16x32xf32>
    %220 = vector.extract_strided_slice %216 {offsets = [0, 96], sizes = [16, 32], strides = [1, 1]} : vector<16x128xf32> to vector<16x32xf32>
    %221 = arith.mulf %218, %205 : vector<16x32xf32>
    %222 = arith.mulf %217, %219 : vector<16x32xf32>
    %223 = arith.addf %221, %222 : vector<16x32xf32>
    %224 = math.tanh %223 : vector<16x32xf32>
    %225 = arith.mulf %220, %224 : vector<16x32xf32>
    %c0_60 = arith.constant 0 : index
    %c0_61 = arith.constant 0 : index
    %226 = vector.load %arg8[%c0_60, %c0_61] : memref<128x32xf32, #tpu.memory_space<vmem>>, vector<16x32xf32>
    tpu.vector_store %arg8[%c0_60, %c0_61], %225 {strides = array<i32>} : memref<128x32xf32, #tpu.memory_space<vmem>>, vector<16x32xf32>,
    %c16_62 = arith.constant 16 : index
    %c0_63 = arith.constant 0 : index
    %227 = vector.load %arg9[%c16_62, %c0_63] : memref<128x128xf32, #tpu.memory_space<vmem>>, vector<16x128xf32>
    %228 = arith.truncf %225 : vector<16x32xf32> to vector<16x32xbf16>
    %cst_64 = arith.constant dense<0.000000e+00> : vector<16x128xf32>
    %229 = tpu.matmul %228, %203, %cst_64 {dimension_numbers = #tpu.dot_dimension_numbers<[1], [0], [0], [1], [0, 0, 1, 1], [], []>} : vector<16x32xbf16>, vector<32x128xbf16>, vector<16x128xf32> -> vector<16x128xf32>
    %230 = arith.addf %227, %229 : vector<16x128xf32>
    %231 = vector.broadcast %8 : vector<1x128xf32> to vector<16x128xf32>
    %232 = arith.mulf %230, %231 : vector<16x128xf32>
    %233 = math.tanh %232 : vector<16x128xf32>
    %234 = vector.broadcast %8 : vector<1x128xf32> to vector<16x128xf32>
    %235 = arith.mulf %233, %234 : vector<16x128xf32>
    %236 = vector.broadcast %11 : vector<1x128xf32> to vector<16x128xf32>
    %237 = arith.addf %235, %236 : vector<16x128xf32>
    %238 = vector.extract_strided_slice %237 {offsets = [0, 0], sizes = [16, 32], strides = [1, 1]} : vector<16x128xf32> to vector<16x32xf32>
    %239 = vector.extract_strided_slice %237 {offsets = [0, 32], sizes = [16, 32], strides = [1, 1]} : vector<16x128xf32> to vector<16x32xf32>
    %240 = vector.extract_strided_slice %237 {offsets = [0, 64], sizes = [16, 32], strides = [1, 1]} : vector<16x128xf32> to vector<16x32xf32>
    %241 = vector.extract_strided_slice %237 {offsets = [0, 96], sizes = [16, 32], strides = [1, 1]} : vector<16x128xf32> to vector<16x32xf32>
    %242 = arith.mulf %239, %223 : vector<16x32xf32>
    %243 = arith.mulf %238, %240 : vector<16x32xf32>
    %244 = arith.addf %242, %243 : vector<16x32xf32>
    %245 = math.tanh %244 : vector<16x32xf32>
    %246 = arith.mulf %241, %245 : vector<16x32xf32>
    %c16_65 = arith.constant 16 : index
    %c0_66 = arith.constant 0 : index
    %247 = vector.load %arg8[%c16_65, %c0_66] : memref<128x32xf32, #tpu.memory_space<vmem>>, vector<16x32xf32>
    tpu.vector_store %arg8[%c16_65, %c0_66], %246 {strides = array<i32>} : memref<128x32xf32, #tpu.memory_space<vmem>>, vector<16x32xf32>,
    %c32_67 = arith.constant 32 : index
    %c0_68 = arith.constant 0 : index
    %248 = vector.load %arg9[%c32_67, %c0_68] : memref<128x128xf32, #tpu.memory_space<vmem>>, vector<16x128xf32>
    %249 = arith.truncf %246 : vector<16x32xf32> to vector<16x32xbf16>
    %cst_69 = arith.constant dense<0.000000e+00> : vector<16x128xf32>
    %250 = tpu.matmul %249, %203, %cst_69 {dimension_numbers = #tpu.dot_dimension_numbers<[1], [0], [0], [1], [0, 0, 1, 1], [], []>} : vector<16x32xbf16>, vector<32x128xbf16>, vector<16x128xf32> -> vector<16x128xf32>
    %251 = arith.addf %248, %250 : vector<16x128xf32>
    %252 = vector.broadcast %8 : vector<1x128xf32> to vector<16x128xf32>
    %253 = arith.mulf %251, %252 : vector<16x128xf32>
    %254 = math.tanh %253 : vector<16x128xf32>
    %255 = vector.broadcast %8 : vector<1x128xf32> to vector<16x128xf32>
    %256 = arith.mulf %254, %255 : vector<16x128xf32>
    %257 = vector.broadcast %11 : vector<1x128xf32> to vector<16x128xf32>
    %258 = arith.addf %256, %257 : vector<16x128xf32>
    %259 = vector.extract_strided_slice %258 {offsets = [0, 0], sizes = [16, 32], strides = [1, 1]} : vector<16x128xf32> to vector<16x32xf32>
    %260 = vector.extract_strided_slice %258 {offsets = [0, 32], sizes = [16, 32], strides = [1, 1]} : vector<16x128xf32> to vector<16x32xf32>
    %261 = vector.extract_strided_slice %258 {offsets = [0, 64], sizes = [16, 32], strides = [1, 1]} : vector<16x128xf32> to vector<16x32xf32>
    %262 = vector.extract_strided_slice %258 {offsets = [0, 96], sizes = [16, 32], strides = [1, 1]} : vector<16x128xf32> to vector<16x32xf32>
    %263 = arith.mulf %260, %244 : vector<16x32xf32>
    %264 = arith.mulf %259, %261 : vector<16x32xf32>
    %265 = arith.addf %263, %264 : vector<16x32xf32>
    %266 = math.tanh %265 : vector<16x32xf32>
    %267 = arith.mulf %262, %266 : vector<16x32xf32>
    %c32_70 = arith.constant 32 : index
    %c0_71 = arith.constant 0 : index
    %268 = vector.load %arg8[%c32_70, %c0_71] : memref<128x32xf32, #tpu.memory_space<vmem>>, vector<16x32xf32>
    tpu.vector_store %arg8[%c32_70, %c0_71], %267 {strides = array<i32>} : memref<128x32xf32, #tpu.memory_space<vmem>>, vector<16x32xf32>,
    %c48_72 = arith.constant 48 : index
    %c0_73 = arith.constant 0 : index
    %269 = vector.load %arg9[%c48_72, %c0_73] : memref<128x128xf32, #tpu.memory_space<vmem>>, vector<16x128xf32>
    %270 = arith.truncf %267 : vector<16x32xf32> to vector<16x32xbf16>
    %cst_74 = arith.constant dense<0.000000e+00> : vector<16x128xf32>
    %271 = tpu.matmul %270, %203, %cst_74 {dimension_numbers = #tpu.dot_dimension_numbers<[1], [0], [0], [1], [0, 0, 1, 1], [], []>} : vector<16x32xbf16>, vector<32x128xbf16>, vector<16x128xf32> -> vector<16x128xf32>
    %272 = arith.addf %269, %271 : vector<16x128xf32>
    %273 = vector.broadcast %8 : vector<1x128xf32> to vector<16x128xf32>
    %274 = arith.mulf %272, %273 : vector<16x128xf32>
    %275 = math.tanh %274 : vector<16x128xf32>
    %276 = vector.broadcast %8 : vector<1x128xf32> to vector<16x128xf32>
    %277 = arith.mulf %275, %276 : vector<16x128xf32>
    %278 = vector.broadcast %11 : vector<1x128xf32> to vector<16x128xf32>
    %279 = arith.addf %277, %278 : vector<16x128xf32>
    %280 = vector.extract_strided_slice %279 {offsets = [0, 0], sizes = [16, 32], strides = [1, 1]} : vector<16x128xf32> to vector<16x32xf32>
    %281 = vector.extract_strided_slice %279 {offsets = [0, 32], sizes = [16, 32], strides = [1, 1]} : vector<16x128xf32> to vector<16x32xf32>
    %282 = vector.extract_strided_slice %279 {offsets = [0, 64], sizes = [16, 32], strides = [1, 1]} : vector<16x128xf32> to vector<16x32xf32>
    %283 = vector.extract_strided_slice %279 {offsets = [0, 96], sizes = [16, 32], strides = [1, 1]} : vector<16x128xf32> to vector<16x32xf32>
    %284 = arith.mulf %281, %265 : vector<16x32xf32>
    %285 = arith.mulf %280, %282 : vector<16x32xf32>
    %286 = arith.addf %284, %285 : vector<16x32xf32>
    %287 = math.tanh %286 : vector<16x32xf32>
    %288 = arith.mulf %283, %287 : vector<16x32xf32>
    %c48_75 = arith.constant 48 : index
    %c0_76 = arith.constant 0 : index
    %289 = vector.load %arg8[%c48_75, %c0_76] : memref<128x32xf32, #tpu.memory_space<vmem>>, vector<16x32xf32>
    tpu.vector_store %arg8[%c48_75, %c0_76], %288 {strides = array<i32>} : memref<128x32xf32, #tpu.memory_space<vmem>>, vector<16x32xf32>,
    %c64_77 = arith.constant 64 : index
    %c0_78 = arith.constant 0 : index
    %290 = vector.load %arg9[%c64_77, %c0_78] : memref<128x128xf32, #tpu.memory_space<vmem>>, vector<16x128xf32>
    %291 = arith.truncf %288 : vector<16x32xf32> to vector<16x32xbf16>
    %cst_79 = arith.constant dense<0.000000e+00> : vector<16x128xf32>
    %292 = tpu.matmul %291, %203, %cst_79 {dimension_numbers = #tpu.dot_dimension_numbers<[1], [0], [0], [1], [0, 0, 1, 1], [], []>} : vector<16x32xbf16>, vector<32x128xbf16>, vector<16x128xf32> -> vector<16x128xf32>
    %293 = arith.addf %290, %292 : vector<16x128xf32>
    %294 = vector.broadcast %8 : vector<1x128xf32> to vector<16x128xf32>
    %295 = arith.mulf %293, %294 : vector<16x128xf32>
    %296 = math.tanh %295 : vector<16x128xf32>
    %297 = vector.broadcast %8 : vector<1x128xf32> to vector<16x128xf32>
    %298 = arith.mulf %296, %297 : vector<16x128xf32>
    %299 = vector.broadcast %11 : vector<1x128xf32> to vector<16x128xf32>
    %300 = arith.addf %298, %299 : vector<16x128xf32>
    %301 = vector.extract_strided_slice %300 {offsets = [0, 0], sizes = [16, 32], strides = [1, 1]} : vector<16x128xf32> to vector<16x32xf32>
    %302 = vector.extract_strided_slice %300 {offsets = [0, 32], sizes = [16, 32], strides = [1, 1]} : vector<16x128xf32> to vector<16x32xf32>
    %303 = vector.extract_strided_slice %300 {offsets = [0, 64], sizes = [16, 32], strides = [1, 1]} : vector<16x128xf32> to vector<16x32xf32>
    %304 = vector.extract_strided_slice %300 {offsets = [0, 96], sizes = [16, 32], strides = [1, 1]} : vector<16x128xf32> to vector<16x32xf32>
    %305 = arith.mulf %302, %286 : vector<16x32xf32>
    %306 = arith.mulf %301, %303 : vector<16x32xf32>
    %307 = arith.addf %305, %306 : vector<16x32xf32>
    %308 = math.tanh %307 : vector<16x32xf32>
    %309 = arith.mulf %304, %308 : vector<16x32xf32>
    %c64_80 = arith.constant 64 : index
    %c0_81 = arith.constant 0 : index
    %310 = vector.load %arg8[%c64_80, %c0_81] : memref<128x32xf32, #tpu.memory_space<vmem>>, vector<16x32xf32>
    tpu.vector_store %arg8[%c64_80, %c0_81], %309 {strides = array<i32>} : memref<128x32xf32, #tpu.memory_space<vmem>>, vector<16x32xf32>,
    %c80_82 = arith.constant 80 : index
    %c0_83 = arith.constant 0 : index
    %311 = vector.load %arg9[%c80_82, %c0_83] : memref<128x128xf32, #tpu.memory_space<vmem>>, vector<16x128xf32>
    %312 = arith.truncf %309 : vector<16x32xf32> to vector<16x32xbf16>
    %cst_84 = arith.constant dense<0.000000e+00> : vector<16x128xf32>
    %313 = tpu.matmul %312, %203, %cst_84 {dimension_numbers = #tpu.dot_dimension_numbers<[1], [0], [0], [1], [0, 0, 1, 1], [], []>} : vector<16x32xbf16>, vector<32x128xbf16>, vector<16x128xf32> -> vector<16x128xf32>
    %314 = arith.addf %311, %313 : vector<16x128xf32>
    %315 = vector.broadcast %8 : vector<1x128xf32> to vector<16x128xf32>
    %316 = arith.mulf %314, %315 : vector<16x128xf32>
    %317 = math.tanh %316 : vector<16x128xf32>
    %318 = vector.broadcast %8 : vector<1x128xf32> to vector<16x128xf32>
    %319 = arith.mulf %317, %318 : vector<16x128xf32>
    %320 = vector.broadcast %11 : vector<1x128xf32> to vector<16x128xf32>
    %321 = arith.addf %319, %320 : vector<16x128xf32>
    %322 = vector.extract_strided_slice %321 {offsets = [0, 0], sizes = [16, 32], strides = [1, 1]} : vector<16x128xf32> to vector<16x32xf32>
    %323 = vector.extract_strided_slice %321 {offsets = [0, 32], sizes = [16, 32], strides = [1, 1]} : vector<16x128xf32> to vector<16x32xf32>
    %324 = vector.extract_strided_slice %321 {offsets = [0, 64], sizes = [16, 32], strides = [1, 1]} : vector<16x128xf32> to vector<16x32xf32>
    %325 = vector.extract_strided_slice %321 {offsets = [0, 96], sizes = [16, 32], strides = [1, 1]} : vector<16x128xf32> to vector<16x32xf32>
    %326 = arith.mulf %323, %307 : vector<16x32xf32>
    %327 = arith.mulf %322, %324 : vector<16x32xf32>
    %328 = arith.addf %326, %327 : vector<16x32xf32>
    %329 = math.tanh %328 : vector<16x32xf32>
    %330 = arith.mulf %325, %329 : vector<16x32xf32>
    %c80_85 = arith.constant 80 : index
    %c0_86 = arith.constant 0 : index
    %331 = vector.load %arg8[%c80_85, %c0_86] : memref<128x32xf32, #tpu.memory_space<vmem>>, vector<16x32xf32>
    tpu.vector_store %arg8[%c80_85, %c0_86], %330 {strides = array<i32>} : memref<128x32xf32, #tpu.memory_space<vmem>>, vector<16x32xf32>,
    %c96_87 = arith.constant 96 : index
    %c0_88 = arith.constant 0 : index
    %332 = vector.load %arg9[%c96_87, %c0_88] : memref<128x128xf32, #tpu.memory_space<vmem>>, vector<16x128xf32>
    %333 = arith.truncf %330 : vector<16x32xf32> to vector<16x32xbf16>
    %cst_89 = arith.constant dense<0.000000e+00> : vector<16x128xf32>
    %334 = tpu.matmul %333, %203, %cst_89 {dimension_numbers = #tpu.dot_dimension_numbers<[1], [0], [0], [1], [0, 0, 1, 1], [], []>} : vector<16x32xbf16>, vector<32x128xbf16>, vector<16x128xf32> -> vector<16x128xf32>
    %335 = arith.addf %332, %334 : vector<16x128xf32>
    %336 = vector.broadcast %8 : vector<1x128xf32> to vector<16x128xf32>
    %337 = arith.mulf %335, %336 : vector<16x128xf32>
    %338 = math.tanh %337 : vector<16x128xf32>
    %339 = vector.broadcast %8 : vector<1x128xf32> to vector<16x128xf32>
    %340 = arith.mulf %338, %339 : vector<16x128xf32>
    %341 = vector.broadcast %11 : vector<1x128xf32> to vector<16x128xf32>
    %342 = arith.addf %340, %341 : vector<16x128xf32>
    %343 = vector.extract_strided_slice %342 {offsets = [0, 0], sizes = [16, 32], strides = [1, 1]} : vector<16x128xf32> to vector<16x32xf32>
    %344 = vector.extract_strided_slice %342 {offsets = [0, 32], sizes = [16, 32], strides = [1, 1]} : vector<16x128xf32> to vector<16x32xf32>
    %345 = vector.extract_strided_slice %342 {offsets = [0, 64], sizes = [16, 32], strides = [1, 1]} : vector<16x128xf32> to vector<16x32xf32>
    %346 = vector.extract_strided_slice %342 {offsets = [0, 96], sizes = [16, 32], strides = [1, 1]} : vector<16x128xf32> to vector<16x32xf32>
    %347 = arith.mulf %344, %328 : vector<16x32xf32>
    %348 = arith.mulf %343, %345 : vector<16x32xf32>
    %349 = arith.addf %347, %348 : vector<16x32xf32>
    %350 = math.tanh %349 : vector<16x32xf32>
    %351 = arith.mulf %346, %350 : vector<16x32xf32>
    %c96_90 = arith.constant 96 : index
    %c0_91 = arith.constant 0 : index
    %352 = vector.load %arg8[%c96_90, %c0_91] : memref<128x32xf32, #tpu.memory_space<vmem>>, vector<16x32xf32>
    tpu.vector_store %arg8[%c96_90, %c0_91], %351 {strides = array<i32>} : memref<128x32xf32, #tpu.memory_space<vmem>>, vector<16x32xf32>,
    %c112_92 = arith.constant 112 : index
    %c0_93 = arith.constant 0 : index
    %353 = vector.load %arg9[%c112_92, %c0_93] : memref<128x128xf32, #tpu.memory_space<vmem>>, vector<16x128xf32>
    %354 = arith.truncf %351 : vector<16x32xf32> to vector<16x32xbf16>
    %cst_94 = arith.constant dense<0.000000e+00> : vector<16x128xf32>
    %355 = tpu.matmul %354, %203, %cst_94 {dimension_numbers = #tpu.dot_dimension_numbers<[1], [0], [0], [1], [0, 0, 1, 1], [], []>} : vector<16x32xbf16>, vector<32x128xbf16>, vector<16x128xf32> -> vector<16x128xf32>
    %356 = arith.addf %353, %355 : vector<16x128xf32>
    %357 = vector.broadcast %8 : vector<1x128xf32> to vector<16x128xf32>
    %358 = arith.mulf %356, %357 : vector<16x128xf32>
    %359 = math.tanh %358 : vector<16x128xf32>
    %360 = vector.broadcast %8 : vector<1x128xf32> to vector<16x128xf32>
    %361 = arith.mulf %359, %360 : vector<16x128xf32>
    %362 = vector.broadcast %11 : vector<1x128xf32> to vector<16x128xf32>
    %363 = arith.addf %361, %362 : vector<16x128xf32>
    %364 = vector.extract_strided_slice %363 {offsets = [0, 0], sizes = [16, 32], strides = [1, 1]} : vector<16x128xf32> to vector<16x32xf32>
    %365 = vector.extract_strided_slice %363 {offsets = [0, 32], sizes = [16, 32], strides = [1, 1]} : vector<16x128xf32> to vector<16x32xf32>
    %366 = vector.extract_strided_slice %363 {offsets = [0, 64], sizes = [16, 32], strides = [1, 1]} : vector<16x128xf32> to vector<16x32xf32>
    %367 = vector.extract_strided_slice %363 {offsets = [0, 96], sizes = [16, 32], strides = [1, 1]} : vector<16x128xf32> to vector<16x32xf32>
    %368 = arith.mulf %365, %349 : vector<16x32xf32>
    %369 = arith.mulf %364, %366 : vector<16x32xf32>
    %370 = arith.addf %368, %369 : vector<16x32xf32>
    %371 = math.tanh %370 : vector<16x32xf32>
    %372 = arith.mulf %367, %371 : vector<16x32xf32>
    %c112_95 = arith.constant 112 : index
    %c0_96 = arith.constant 0 : index
    %373 = vector.load %arg8[%c112_95, %c0_96] : memref<128x32xf32, #tpu.memory_space<vmem>>, vector<16x32xf32>
    tpu.vector_store %arg8[%c112_95, %c0_96], %372 {strides = array<i32>} : memref<128x32xf32, #tpu.memory_space<vmem>>, vector<16x32xf32>,
    %c0_97 = arith.constant 0 : index
    %c0_98 = arith.constant 0 : index
    %374 = vector.load %arg5[%c0_97, %c0_98] : memref<1x32xf32, #tpu.memory_space<vmem>>, vector<1x32xf32>
    %c0_99 = arith.constant 0 : index
    %c0_100 = arith.constant 0 : index
    %375 = vector.load %arg8[%c0_99, %c0_100] : memref<128x32xf32, #tpu.memory_space<vmem>>, vector<128x32xf32>
    %376 = vector.broadcast %374 : vector<1x32xf32> to vector<128x32xf32>
    %377 = arith.mulf %375, %376 : vector<128x32xf32>
    %cst_101 = arith.constant dense<0.000000e+00> : vector<128xf32>
    %378 = vector.multi_reduction <add>, %377, %cst_101 [1] : vector<128x32xf32> to vector<128xf32>
    %379 = vector.shape_cast %378 : vector<128xf32> to vector<128x1xf32>
    %c0_102 = arith.constant 0 : index
    %c0_103 = arith.constant 0 : index
    %380 = vector.load %arg6[%c0_102, %c0_103] : memref<1x1xf32, #tpu.memory_space<vmem>>, vector<1x1xf32>
    %381 = vector.broadcast %380 : vector<1x1xf32> to vector<128x1xf32>
    %382 = arith.addf %379, %381 : vector<128x1xf32>
    %c0_104 = arith.constant 0 : index
    %c0_105 = arith.constant 0 : index
    %383 = vector.load %arg7[%c0_104, %c0_105] : memref<128x1xf32, #tpu.memory_space<vmem>>, vector<128x1xf32>
    tpu.vector_store %arg7[%c0_104, %c0_105], %382 {strides = array<i32>} : memref<128x1xf32, #tpu.memory_space<vmem>>, vector<128x1xf32>,
    return
  }
  func.func @transform_0(%arg0: i32) -> (i32, i32, i32) {
    %c0_i32 = arith.constant 0 : i32
    %c0_i32_0 = arith.constant 0 : i32
    %c0_i32_1 = arith.constant 0 : i32
    return %c0_i32, %arg0, %c0_i32_0 : i32, i32, i32
  }
  func.func @transform_1(%arg0: i32) -> (i32, i32, i32) {
    %c0_i32 = arith.constant 0 : i32
    %c0_i32_0 = arith.constant 0 : i32
    %c0_i32_1 = arith.constant 0 : i32
    %c0_i32_2 = arith.constant 0 : i32
    return %c0_i32, %c0_i32_0, %c0_i32_1 : i32, i32, i32
  }
  func.func @transform_2(%arg0: i32) -> (i32, i32, i32) {
    %c0_i32 = arith.constant 0 : i32
    %c0_i32_0 = arith.constant 0 : i32
    %c0_i32_1 = arith.constant 0 : i32
    %c0_i32_2 = arith.constant 0 : i32
    return %c0_i32, %c0_i32_0, %c0_i32_1 : i32, i32, i32
  }
  func.func @transform_3(%arg0: i32) -> (i32, i32, i32) {
    %c0_i32 = arith.constant 0 : i32
    %c0_i32_0 = arith.constant 0 : i32
    %c0_i32_1 = arith.constant 0 : i32
    %c0_i32_2 = arith.constant 0 : i32
    return %c0_i32, %c0_i32_0, %c0_i32_1 : i32, i32, i32
  }
  func.func @transform_4(%arg0: i32) -> (i32, i32) {
    %c0_i32 = arith.constant 0 : i32
    %c0_i32_0 = arith.constant 0 : i32
    %c0_i32_1 = arith.constant 0 : i32
    return %c0_i32, %c0_i32_0 : i32, i32
  }
  func.func @transform_5(%arg0: i32) -> (i32, i32) {
    %c0_i32 = arith.constant 0 : i32
    %c0_i32_0 = arith.constant 0 : i32
    %c0_i32_1 = arith.constant 0 : i32
    return %c0_i32, %c0_i32_0 : i32, i32
  }
  func.func @transform_6(%arg0: i32) -> (i32, i32) {
    %c0_i32 = arith.constant 0 : i32
    %c0_i32_0 = arith.constant 0 : i32
    return %arg0, %c0_i32 : i32, i32
  }
}

</mosaic_0001>

<llo_original>
// kernel: tpu_custom_call.1
$region0: #{tpu_custom_call.1}
  #allocation0 [shape = 'u32[]', space=smem, size = 0x4, offset = 0x4, fixed_abs, tag = 'smem constant byte address 0x4 - core index']
  #allocation1 [shape = 'u32[72,128]{1,0:T(1,128)}', space=vmem, size = 0x9000, scoped, tag = 'internal scratch']
  #allocation2 [shape = 'f32[128,32]{1,0:T(8,128)}', space=vmem, size = 0x10000, scoped, tag = 'scratch operand']
  #allocation3 [shape = 'f32[128,128]{1,0:T(8,128)}', space=vmem, size = 0x10000, scoped, tag = 'scratch operand']
  #allocation4 [shape = 'f32[1,1]{1,0:T(1,128)S(1)}', space=vmem, size = 0x200, scoped, tag = 'scoped memory for tpu_custom_call.1']
  %s0 = inlined_call_operand.hbm [shape: f32[8,16,128], index: 0, kind: input, shape index: {}]
  %s1 = inlined_call_operand.hbm [shape: bf16[1,32,128], index: 1, kind: input, shape index: {}]
  %s2 = inlined_call_operand.hbm [shape: bf16[2,32,128], index: 2, kind: input, shape index: {}]
  %s3 = inlined_call_operand.vmem [shape: f32[1,1,128], index: 3, kind: input, shape index: {}]
  %s4 = inlined_call_operand.vmem [shape: f32[1,32], index: 4, kind: input, shape index: {}]
  %s5 = inlined_call_operand.<no memory space> [shape: f32[1,1], index: 5, kind: input, shape index: {}]
  %s6 = inlined_call_operand.vmem [shape: f32[128,1], index: 6, kind: output, shape index: {}]
  %s7 = sld [smem:[#allocation0]]
  $region46: #{tpu_custom_call.1} parent=0
    _
  %s9 = ssub.s32 1, %s7
  %s10 = scalar_select 0, %s9, %s7
  %v11 = vstv %s5
  %12 = vst [vmem:[#allocation4] sm:$0x1] %v11
  $region1: #{tpu_custom_call.1} parent=0
    #allocation5 [shape = 'u8[65536]{0}', space=vmem, size = 0x10000, scoped, tag = 'input window, operand 0, single buffered']
    #allocation6 [shape = 's32[1]{0}', space=sflag, size = 0x4, scoped, tag = 'scoped memory for tpu_custom_call.1']
    #allocation7 [shape = 'u8[8192]{0}', space=vmem, size = 0x2000, scoped, tag = 'input window, operand 1, single buffered']
    #allocation8 [shape = 's32[1]{0}', space=sflag, size = 0x4, scoped, tag = 'scoped memory for tpu_custom_call.1']
    #allocation9 [shape = 'u8[16384]{0}', space=vmem, size = 0x4000, scoped, tag = 'input window, operand 2, single buffered']
    %13 = vsyncpa [#allocation6], 0
    %14 = vsyncpa [#allocation8], 0
    // Predicated region
    $region2: #{tpu_custom_call.1} parent=1 // pred_check
      _
    $region3: #{tpu_custom_call.1} parent=1 // pred_check_branch
      %16 = sbr.rel (0) target = $region5
    $region4: #{tpu_custom_call.1} parent=1 // pred_region
      %18 = vsyncadd [#allocation6], 0
      %s19 = sshll.u32 %s0, 4
      %s20 = int_to_ptr.hbm [resolvable:$true] %s19
      %s21 = sshll.u32 [#allocation5], 4
      %s22 = int_to_ptr.vmem [resolvable:$true] %s21
      %27 = dma.hbm_to_vmem [thread:$0]  %s20, 2048, %s22, [#allocation6], 128, 128, 8
    $region5: #{tpu_custom_call.1} parent=1 // pred_fallthru
      _
    // Predicated region
    $region6: #{tpu_custom_call.1} parent=1 // pred_check
      _
    $region7: #{tpu_custom_call.1} parent=1 // pred_check_branch
      %29 = sbr.rel (0) target = $region9
    $region8: #{tpu_custom_call.1} parent=1 // pred_region
      %31 = vsyncadd [#allocation8], 0
      %s32 = sshll.u32 %s1, 4
      %s33 = int_to_ptr.hbm [resolvable:$true] %s32
      %s34 = sshll.u32 [#allocation7], 4
      %s35 = int_to_ptr.vmem [resolvable:$true] %s34
      %40 = dma.hbm_to_vmem [thread:$0]  %s33, 256, %s35, [#allocation8], 64, 64, 4
    $region9: #{tpu_custom_call.1} parent=1 // pred_fallthru
      _
    // Predicated region
    $region10: #{tpu_custom_call.1} parent=1 // pred_check
      _
    $region11: #{tpu_custom_call.1} parent=1 // pred_check_branch
      %42 = sbr.rel (0) target = $region13
    $region12: #{tpu_custom_call.1} parent=1 // pred_region
      %44 = vsyncadd [#allocation8], 0
      %s45 = sshll.u32 %s2, 4
      %s46 = int_to_ptr.hbm [resolvable:$true] %s45
      %s47 = sshll.u32 [#allocation9], 4
      %s48 = int_to_ptr.vmem [resolvable:$true] %s47
      %53 = dma.hbm_to_vmem [thread:$0]  %s46, 512, %s48, [#allocation8], 64, 64, 4
    $region13: #{tpu_custom_call.1} parent=1 // pred_fallthru
      _
    // Predicated region
    $region14: #{tpu_custom_call.1} parent=1 // pred_check
      _
    $region15: #{tpu_custom_call.1} parent=1 // pred_check_branch
      %55 = sbr.rel (0) target = $region17
    $region16: #{tpu_custom_call.1} parent=1 // pred_region
      _
    $region17: #{tpu_custom_call.1} parent=1 // pred_fallthru
      _
    // Predicated region
    $region18: #{tpu_custom_call.1} parent=1 // pred_check
      _
    $region19: #{tpu_custom_call.1} parent=1 // pred_check_branch
      %57 = sbr.rel (0) target = $region21
    $region20: #{tpu_custom_call.1} parent=1 // pred_region
      _
    $region21: #{tpu_custom_call.1} parent=1 // pred_fallthru
      _
    // Predicated region
    $region22: #{tpu_custom_call.1} parent=1 // pred_check
      _
    $region23: #{tpu_custom_call.1} parent=1 // pred_check_branch
      %59 = sbr.rel (0) target = $region25
    $region24: #{tpu_custom_call.1} parent=1 // pred_region
      _
    $region25: #{tpu_custom_call.1} parent=1 // pred_fallthru
      _
    // Predicated region
    $region26: #{tpu_custom_call.1} parent=1 // pred_check
      _
    $region27: #{tpu_custom_call.1} parent=1 // pred_check_branch
      %61 = sbr.rel (0) target = $region29
    $region28: #{tpu_custom_call.1} parent=1 // pred_region
      %63 = dma.done [#allocation6], 2048
    $region29: #{tpu_custom_call.1} parent=1 // pred_fallthru
      _
    // Predicated region
    $region30: #{tpu_custom_call.1} parent=1 // pred_check
      _
    $region31: #{tpu_custom_call.1} parent=1 // pred_check_branch
      %65 = sbr.rel (0) target = $region33
    $region32: #{tpu_custom_call.1} parent=1 // pred_region
      %67 = dma.done [#allocation8], 256
    $region33: #{tpu_custom_call.1} parent=1 // pred_fallthru
      _
    // Predicated region
    $region34: #{tpu_custom_call.1} parent=1 // pred_check
      _
    $region35: #{tpu_custom_call.1} parent=1 // pred_check_branch
      %69 = sbr.rel (0) target = $region37
    $region36: #{tpu_custom_call.1} parent=1 // pred_region
      %71 = dma.done [#allocation8], 512
    $region37: #{tpu_custom_call.1} parent=1 // pred_fallthru
      _
    %v73 = vlaneseq
    %v74 = vand.u32 %v73, 127
    %vm75 = vcmp.ge.s32.totalorder %v74, 64
    %vm76 = vcmp.lt.s32.totalorder %v74, 96
    %vm77 = vmand %vm75, %vm76
    %v78 = vsel %vm77, 1.0, 0.5
    %v79 = vsel %vm77, 0.0, 0.5
    %v80 = vld [vmem:[#allocation9] sm:$0xf]
    %v81 = vld [vmem:[#allocation9 + $0x4] sm:$0xf]
    %v82 = vld [vmem:[#allocation9 + $0x8] sm:$0xf]
    %v83 = vld [vmem:[#allocation9 + $0xc] sm:$0xf]
    %v84 = vld [vmem:[#allocation5] sm:$0xff]
    %v85 = vld [vmem:[#allocation5 + $0x8] sm:$0xff]
    %v90 = vunpack.c.l.b16 %v80
    %v91 = vunpack.c.l.b16 %v81
    %v92 = vunpack.c.l.b16 %v82
    %v93 = vunpack.c.l.b16 %v83
    %v94 = vpack.c.b16 %v91, %v90
    %v95 = vpack.c.b16 %v93, %v92
    %vm98 = vcmask 261120
    %v100 = vsel %vm98, 0, 0
    %102 = vmatpush.bf16.msra.mxu0 0
    %103 = vmatpush.bf16.msra.mxu0 0
    %104 = vmatpush.bf16.msra.mxu0 0
    %105 = vmatpush.bf16.msra.mxu0 0
    %106 = vmatpush.bf16.msra.mxu0 0
    %107 = vmatpush.bf16.msra.mxu0 0
    %108 = vmatpush.bf16.msra.mxu0 %v95
    %109 = vmatpush.bf16.msra.mxu0 %v94
    %110 = vmatmul.bf16.gmra.mxu0 %v100
    %v111 = vpop.f32.mrf.mxu0
    %v112 = vadd.f32 0.0, %v111
    %v113 = vpop.f32.mrf.mxu0
    %v114 = vadd.f32 0.0, %v113
    %115 = vdwg.mxu0
    %v116 = vadd.f32 %v84, %v112
    %v117 = vadd.f32 %v85, %v114
    %v118 = vmul.f32 %v116, %v78
    %v119 = vmul.f32 %v117, %v78
    %v120 = vtanh.pop %v118
    %v121 = vtanh.pop %v119
    %v122 = vmul.f32 %v120, %v78
    %v123 = vmul.f32 %v121, %v78
    %v124 = vadd.f32 %v122, %v79
    %v125 = vadd.f32 %v123, %v79
    %v126 = vmul.f32 %v124, 0.0
    %v127 = vmul.f32 %v125, 0.0
    %130 = vrot.lane.b32.xlu0 %v124, 64
    %v131 = vpop.permute.xlu0 %130
    %132 = vrot.lane.b32.xlu0 %v125, 64
    %v133 = vpop.permute.xlu0 %132
    %v136 = vmul.f32 %v124, %v131
    %v137 = vmul.f32 %v125, %v133
    %140 = vrot.lane.b32.xlu0 %v136, 32
    %v141 = vpop.permute.xlu0 %140
    %142 = vrot.lane.b32.xlu0 %v137, 32
    %v143 = vpop.permute.xlu0 %142
    %v146 = vadd.f32 %v126, %v141
    %v147 = vadd.f32 %v127, %v143
    %v148 = vtanh.pop %v146
    %v149 = vtanh.pop %v147
    %152 = vrot.lane.b32.xlu0 %v148, 64
    %v153 = vpop.permute.xlu0 %152
    %154 = vrot.lane.b32.xlu0 %v149, 64
    %v155 = vpop.permute.xlu0 %154
    %v158 = vmul.f32 %v124, %v153
    %v159 = vmul.f32 %v125, %v155
    %162 = vrot.lane.b32.xlu0 %v158, 32
    %v163 = vpop.permute.xlu0 %162
    %164 = vrot.lane.b32.xlu0 %v159, 32
    %v165 = vpop.permute.xlu0 %164
    %168 = vst.msk [vmem:[#allocation2] sm:$0xff] %vm98, %v163
    %169 = vst.msk [vmem:[#allocation2 + $0x8] sm:$0xff] %vm98, %v165
    %s170 = scalar_lea.vmem [#allocation5], 16
    %v171 = vld [vmem:[%s170] sm:$0xff]
    %v172 = vld [vmem:[%s170 + $0x8] sm:$0xff]
    %v173 = vpack.c.bf16 %v159, %v158
    %175 = vrot.lane.b32.xlu0 %v173, 32
    %v176 = vpop.permute.xlu0 %175
    %v178 = vsel %vm98, %v176, 0
    %180 = vmatpush.bf16.msra.mxu0 0
    %181 = vmatpush.bf16.msra.mxu0 0
    %182 = vmatpush.bf16.msra.mxu0 0
    %183 = vmatpush.bf16.msra.mxu0 0
    %184 = vmatpush.bf16.msra.mxu0 0
    %185 = vmatpush.bf16.msra.mxu0 0
    %186 = vmatpush.bf16.msra.mxu0 %v95
    %187 = vmatpush.bf16.msra.mxu0 %v94
    %188 = vmatmul.bf16.gmra.mxu0 %v178
    %v189 = vpop.f32.mrf.mxu0
    %v190 = vadd.f32 0.0, %v189
    %v191 = vpop.f32.mrf.mxu0
    %v192 = vadd.f32 0.0, %v191
    %193 = vdwg.mxu0
    %v194 = vadd.f32 %v171, %v190
    %v195 = vadd.f32 %v172, %v192
    %v196 = vmul.f32 %v194, %v78
    %v197 = vmul.f32 %v195, %v78
    %v198 = vtanh.pop %v196
    %v199 = vtanh.pop %v197
    %v200 = vmul.f32 %v198, %v78
    %v201 = vmul.f32 %v199, %v78
    %v202 = vadd.f32 %v200, %v79
    %v203 = vadd.f32 %v201, %v79
    %v204 = vmul.f32 %v202, %v146
    %v205 = vmul.f32 %v203, %v147
    %208 = vrot.lane.b32.xlu0 %v202, 64
    %v209 = vpop.permute.xlu0 %208
    %210 = vrot.lane.b32.xlu0 %v203, 64
    %v211 = vpop.permute.xlu0 %210
    %v214 = vmul.f32 %v202, %v209
    %v215 = vmul.f32 %v203, %v211
    %218 = vrot.lane.b32.xlu0 %v214, 32
    %v219 = vpop.permute.xlu0 %218
    %220 = vrot.lane.b32.xlu0 %v215, 32
    %v221 = vpop.permute.xlu0 %220
    %v224 = vadd.f32 %v204, %v219
    %v225 = vadd.f32 %v205, %v221
    %v226 = vtanh.pop %v224
    %v227 = vtanh.pop %v225
    %230 = vrot.lane.b32.xlu0 %v226, 64
    %v231 = vpop.permute.xlu0 %230
    %232 = vrot.lane.b32.xlu0 %v227, 64
    %v233 = vpop.permute.xlu0 %232
    %v236 = vmul.f32 %v202, %v231
    %v237 = vmul.f32 %v203, %v233
    %240 = vrot.lane.b32.xlu0 %v236, 32
    %v241 = vpop.permute.xlu0 %240
    %242 = vrot.lane.b32.xlu0 %v237, 32
    %v243 = vpop.permute.xlu0 %242
    %246 = vst.msk [vmem:[#allocation2 + $0x10] sm:$0xff] %vm98, %v241
    %247 = vst.msk [vmem:[#allocation2 + $0x18] sm:$0xff] %vm98, %v243
    %s248 = scalar_lea.vmem [#allocation5], 32
    %v249 = vld [vmem:[%s248] sm:$0xff]
    %v250 = vld [vmem:[%s248 + $0x8] sm:$0xff]
    %v251 = vpack.c.bf16 %v237, %v236
    %253 = vrot.lane.b32.xlu0 %v251, 32
    %v254 = vpop.permute.xlu0 %253
    %v256 = vsel %vm98, %v254, 0
    %258 = vmatpush.bf16.msra.mxu0 0
    %259 = vmatpush.bf16.msra.mxu0 0
    %260 = vmatpush.bf16.msra.mxu0 0
    %261 = vmatpush.bf16.msra.mxu0 0
    %262 = vmatpush.bf16.msra.mxu0 0
    %263 = vmatpush.bf16.msra.mxu0 0
    %264 = vmatpush.bf16.msra.mxu0 %v95
    %265 = vmatpush.bf16.msra.mxu0 %v94
    %266 = vmatmul.bf16.gmra.mxu0 %v256
    %v267 = vpop.f32.mrf.mxu0
    %v268 = vadd.f32 0.0, %v267
    %v269 = vpop.f32.mrf.mxu0
    %v270 = vadd.f32 0.0, %v269
    %271 = vdwg.mxu0
    %v272 = vadd.f32 %v249, %v268
    %v273 = vadd.f32 %v250, %v270
    %v274 = vmul.f32 %v272, %v78
    %v275 = vmul.f32 %v273, %v78
    %v276 = vtanh.pop %v274
    %v277 = vtanh.pop %v275
    %v278 = vmul.f32 %v276, %v78
    %v279 = vmul.f32 %v277, %v78
    %v280 = vadd.f32 %v278, %v79
    %v281 = vadd.f32 %v279, %v79
    %v282 = vmul.f32 %v280, %v224
    %v283 = vmul.f32 %v281, %v225
    %286 = vrot.lane.b32.xlu0 %v280, 64
    %v287 = vpop.permute.xlu0 %286
    %288 = vrot.lane.b32.xlu0 %v281, 64
    %v289 = vpop.permute.xlu0 %288
    %v292 = vmul.f32 %v280, %v287
    %v293 = vmul.f32 %v281, %v289
    %296 = vrot.lane.b32.xlu0 %v292, 32
    %v297 = vpop.permute.xlu0 %296
    %298 = vrot.lane.b32.xlu0 %v293, 32
    %v299 = vpop.permute.xlu0 %298
    %v302 = vadd.f32 %v282, %v297
    %v303 = vadd.f32 %v283, %v299
    %v304 = vtanh.pop %v302
    %v305 = vtanh.pop %v303
    %308 = vrot.lane.b32.xlu0 %v304, 64
    %v309 = vpop.permute.xlu0 %308
    %310 = vrot.lane.b32.xlu0 %v305, 64
    %v311 = vpop.permute.xlu0 %310
    %v314 = vmul.f32 %v280, %v309
    %v315 = vmul.f32 %v281, %v311
    %318 = vrot.lane.b32.xlu0 %v314, 32
    %v319 = vpop.permute.xlu0 %318
    %320 = vrot.lane.b32.xlu0 %v315, 32
    %v321 = vpop.permute.xlu0 %320
    %324 = vst.msk [vmem:[#allocation2 + $0x20] sm:$0xff] %vm98, %v319
    %325 = vst.msk [vmem:[#allocation2 + $0x28] sm:$0xff] %vm98, %v321
    %s326 = scalar_lea.vmem [#allocation5], 48
    %v327 = vld [vmem:[%s326] sm:$0xff]
    %v328 = vld [vmem:[%s326 + $0x8] sm:$0xff]
    %v329 = vpack.c.bf16 %v315, %v314
    %331 = vrot.lane.b32.xlu0 %v329, 32
    %v332 = vpop.permute.xlu0 %331
    %v334 = vsel %vm98, %v332, 0
    %336 = vmatpush.bf16.msra.mxu0 0
    %337 = vmatpush.bf16.msra.mxu0 0
    %338 = vmatpush.bf16.msra.mxu0 0
    %339 = vmatpush.bf16.msra.mxu0 0
    %340 = vmatpush.bf16.msra.mxu0 0
    %341 = vmatpush.bf16.msra.mxu0 0
    %342 = vmatpush.bf16.msra.mxu0 %v95
    %343 = vmatpush.bf16.msra.mxu0 %v94
    %344 = vmatmul.bf16.gmra.mxu0 %v334
    %v345 = vpop.f32.mrf.mxu0
    %v346 = vadd.f32 0.0, %v345
    %v347 = vpop.f32.mrf.mxu0
    %v348 = vadd.f32 0.0, %v347
    %349 = vdwg.mxu0
    %v350 = vadd.f32 %v327, %v346
    %v351 = vadd.f32 %v328, %v348
    %v352 = vmul.f32 %v350, %v78
    %v353 = vmul.f32 %v351, %v78
    %v354 = vtanh.pop %v352
    %v355 = vtanh.pop %v353
    %v356 = vmul.f32 %v354, %v78
    %v357 = vmul.f32 %v355, %v78
    %v358 = vadd.f32 %v356, %v79
    %v359 = vadd.f32 %v357, %v79
    %v360 = vmul.f32 %v358, %v302
    %v361 = vmul.f32 %v359, %v303
    %364 = vrot.lane.b32.xlu0 %v358, 64
    %v365 = vpop.permute.xlu0 %364
    %366 = vrot.lane.b32.xlu0 %v359, 64
    %v367 = vpop.permute.xlu0 %366
    %v370 = vmul.f32 %v358, %v365
    %v371 = vmul.f32 %v359, %v367
    %374 = vrot.lane.b32.xlu0 %v370, 32
    %v375 = vpop.permute.xlu0 %374
    %376 = vrot.lane.b32.xlu0 %v371, 32
    %v377 = vpop.permute.xlu0 %376
    %v380 = vadd.f32 %v360, %v375
    %v381 = vadd.f32 %v361, %v377
    %v382 = vtanh.pop %v380
    %v383 = vtanh.pop %v381
    %386 = vrot.lane.b32.xlu0 %v382, 64
    %v387 = vpop.permute.xlu0 %386
    %388 = vrot.lane.b32.xlu0 %v383, 64
    %v389 = vpop.permute.xlu0 %388
    %v392 = vmul.f32 %v358, %v387
    %v393 = vmul.f32 %v359, %v389
    %396 = vrot.lane.b32.xlu0 %v392, 32
    %v397 = vpop.permute.xlu0 %396
    %398 = vrot.lane.b32.xlu0 %v393, 32
    %v399 = vpop.permute.xlu0 %398
    %402 = vst.msk [vmem:[#allocation2 + $0x30] sm:$0xff] %vm98, %v397
    %403 = vst.msk [vmem:[#allocation2 + $0x38] sm:$0xff] %vm98, %v399
    %s404 = scalar_lea.vmem [#allocation5], 64
    %v405 = vld [vmem:[%s404] sm:$0xff]
    %v406 = vld [vmem:[%s404 + $0x8] sm:$0xff]
    %v407 = vpack.c.bf16 %v393, %v392
    %409 = vrot.lane.b32.xlu0 %v407, 32
    %v410 = vpop.permute.xlu0 %409
    %v412 = vsel %vm98, %v410, 0
    %414 = vmatpush.bf16.msra.mxu0 0
    %415 = vmatpush.bf16.msra.mxu0 0
    %416 = vmatpush.bf16.msra.mxu0 0
    %417 = vmatpush.bf16.msra.mxu0 0
    %418 = vmatpush.bf16.msra.mxu0 0
    %419 = vmatpush.bf16.msra.mxu0 0
    %420 = vmatpush.bf16.msra.mxu0 %v95
    %421 = vmatpush.bf16.msra.mxu0 %v94
    %422 = vmatmul.bf16.gmra.mxu0 %v412
    %v423 = vpop.f32.mrf.mxu0
    %v424 = vadd.f32 0.0, %v423
    %v425 = vpop.f32.mrf.mxu0
    %v426 = vadd.f32 0.0, %v425
    %427 = vdwg.mxu0
    %v428 = vadd.f32 %v405, %v424
    %v429 = vadd.f32 %v406, %v426
    %v430 = vmul.f32 %v428, %v78
    %v431 = vmul.f32 %v429, %v78
    %v432 = vtanh.pop %v430
    %v433 = vtanh.pop %v431
    %v434 = vmul.f32 %v432, %v78
    %v435 = vmul.f32 %v433, %v78
    %v436 = vadd.f32 %v434, %v79
    %v437 = vadd.f32 %v435, %v79
    %v438 = vmul.f32 %v436, %v380
    %v439 = vmul.f32 %v437, %v381
    %442 = vrot.lane.b32.xlu0 %v436, 64
    %v443 = vpop.permute.xlu0 %442
    %444 = vrot.lane.b32.xlu0 %v437, 64
    %v445 = vpop.permute.xlu0 %444
    %v448 = vmul.f32 %v436, %v443
    %v449 = vmul.f32 %v437, %v445
    %452 = vrot.lane.b32.xlu0 %v448, 32
    %v453 = vpop.permute.xlu0 %452
    %454 = vrot.lane.b32.xlu0 %v449, 32
    %v455 = vpop.permute.xlu0 %454
    %v458 = vadd.f32 %v438, %v453
    %v459 = vadd.f32 %v439, %v455
    %v460 = vtanh.pop %v458
    %v461 = vtanh.pop %v459
    %464 = vrot.lane.b32.xlu0 %v460, 64
    %v465 = vpop.permute.xlu0 %464
    %466 = vrot.lane.b32.xlu0 %v461, 64
    %v467 = vpop.permute.xlu0 %466
    %v470 = vmul.f32 %v436, %v465
    %v471 = vmul.f32 %v437, %v467
    %474 = vrot.lane.b32.xlu0 %v470, 32
    %v475 = vpop.permute.xlu0 %474
    %476 = vrot.lane.b32.xlu0 %v471, 32
    %v477 = vpop.permute.xlu0 %476
    %480 = vst.msk [vmem:[#allocation2 + $0x40] sm:$0xff] %vm98, %v475
    %481 = vst.msk [vmem:[#allocation2 + $0x48] sm:$0xff] %vm98, %v477
    %s482 = scalar_lea.vmem [#allocation5], 80
    %v483 = vld [vmem:[%s482] sm:$0xff]
    %v484 = vld [vmem:[%s482 + $0x8] sm:$0xff]
    %v485 = vpack.c.bf16 %v471, %v470
    %487 = vrot.lane.b32.xlu0 %v485, 32
    %v488 = vpop.permute.xlu0 %487
    %v490 = vsel %vm98, %v488, 0
    %492 = vmatpush.bf16.msra.mxu0 0
    %493 = vmatpush.bf16.msra.mxu0 0
    %494 = vmatpush.bf16.msra.mxu0 0
    %495 = vmatpush.bf16.msra.mxu0 0
    %496 = vmatpush.bf16.msra.mxu0 0
    %497 = vmatpush.bf16.msra.mxu0 0
    %498 = vmatpush.bf16.msra.mxu0 %v95
    %499 = vmatpush.bf16.msra.mxu0 %v94
    %500 = vmatmul.bf16.gmra.mxu0 %v490
    %v501 = vpop.f32.mrf.mxu0
    %v502 = vadd.f32 0.0, %v501
    %v503 = vpop.f32.mrf.mxu0
    %v504 = vadd.f32 0.0, %v503
    %505 = vdwg.mxu0
    %v506 = vadd.f32 %v483, %v502
    %v507 = vadd.f32 %v484, %v504
    %v508 = vmul.f32 %v506, %v78
    %v509 = vmul.f32 %v507, %v78
    %v510 = vtanh.pop %v508
    %v511 = vtanh.pop %v509
    %v512 = vmul.f32 %v510, %v78
    %v513 = vmul.f32 %v511, %v78
    %v514 = vadd.f32 %v512, %v79
    %v515 = vadd.f32 %v513, %v79
    %v516 = vmul.f32 %v514, %v458
    %v517 = vmul.f32 %v515, %v459
    %520 = vrot.lane.b32.xlu0 %v514, 64
    %v521 = vpop.permute.xlu0 %520
    %522 = vrot.lane.b32.xlu0 %v515, 64
    %v523 = vpop.permute.xlu0 %522
    %v526 = vmul.f32 %v514, %v521
    %v527 = vmul.f32 %v515, %v523
    %530 = vrot.lane.b32.xlu0 %v526, 32
    %v531 = vpop.permute.xlu0 %530
    %532 = vrot.lane.b32.xlu0 %v527, 32
    %v533 = vpop.permute.xlu0 %532
    %v536 = vadd.f32 %v516, %v531
    %v537 = vadd.f32 %v517, %v533
    %v538 = vtanh.pop %v536
    %v539 = vtanh.pop %v537
    %542 = vrot.lane.b32.xlu0 %v538, 64
    %v543 = vpop.permute.xlu0 %542
    %544 = vrot.lane.b32.xlu0 %v539, 64
    %v545 = vpop.permute.xlu0 %544
    %v548 = vmul.f32 %v514, %v543
    %v549 = vmul.f32 %v515, %v545
    %552 = vrot.lane.b32.xlu0 %v548, 32
    %v553 = vpop.permute.xlu0 %552
    %554 = vrot.lane.b32.xlu0 %v549, 32
    %v555 = vpop.permute.xlu0 %554
    %558 = vst.msk [vmem:[#allocation2 + $0x50] sm:$0xff] %vm98, %v553
    %559 = vst.msk [vmem:[#allocation2 + $0x58] sm:$0xff] %vm98, %v555
    %s560 = scalar_lea.vmem [#allocation5], 96
    %v561 = vld [vmem:[%s560] sm:$0xff]
    %v562 = vld [vmem:[%s560 + $0x8] sm:$0xff]
    %v563 = vpack.c.bf16 %v549, %v548
    %565 = vrot.lane.b32.xlu0 %v563, 32
    %v566 = vpop.permute.xlu0 %565
    %v568 = vsel %vm98, %v566, 0
    %570 = vmatpush.bf16.msra.mxu0 0
    %571 = vmatpush.bf16.msra.mxu0 0
    %572 = vmatpush.bf16.msra.mxu0 0
    %573 = vmatpush.bf16.msra.mxu0 0
    %574 = vmatpush.bf16.msra.mxu0 0
    %575 = vmatpush.bf16.msra.mxu0 0
    %576 = vmatpush.bf16.msra.mxu0 %v95
    %577 = vmatpush.bf16.msra.mxu0 %v94
    %578 = vmatmul.bf16.gmra.mxu0 %v568
    %v579 = vpop.f32.mrf.mxu0
    %v580 = vadd.f32 0.0, %v579
    %v581 = vpop.f32.mrf.mxu0
    %v582 = vadd.f32 0.0, %v581
    %583 = vdwg.mxu0
    %v584 = vadd.f32 %v561, %v580
    %v585 = vadd.f32 %v562, %v582
    %v586 = vmul.f32 %v584, %v78
    %v587 = vmul.f32 %v585, %v78
    %v588 = vtanh.pop %v586
    %v589 = vtanh.pop %v587
    %v590 = vmul.f32 %v588, %v78
    %v591 = vmul.f32 %v589, %v78
    %v592 = vadd.f32 %v590, %v79
    %v593 = vadd.f32 %v591, %v79
    %v594 = vmul.f32 %v592, %v536
    %v595 = vmul.f32 %v593, %v537
    %598 = vrot.lane.b32.xlu0 %v592, 64
    %v599 = vpop.permute.xlu0 %598
    %600 = vrot.lane.b32.xlu0 %v593, 64
    %v601 = vpop.permute.xlu0 %600
    %v604 = vmul.f32 %v592, %v599
    %v605 = vmul.f32 %v593, %v601
    %608 = vrot.lane.b32.xlu0 %v604, 32
    %v609 = vpop.permute.xlu0 %608
    %610 = vrot.lane.b32.xlu0 %v605, 32
    %v611 = vpop.permute.xlu0 %610
    %v614 = vadd.f32 %v594, %v609
    %v615 = vadd.f32 %v595, %v611
    %v616 = vtanh.pop %v614
    %v617 = vtanh.pop %v615
    %620 = vrot.lane.b32.xlu0 %v616, 64
    %v621 = vpop.permute.xlu0 %620
    %622 = vrot.lane.b32.xlu0 %v617, 64
    %v623 = vpop.permute.xlu0 %622
    %v626 = vmul.f32 %v592, %v621
    %v627 = vmul.f32 %v593, %v623
    %630 = vrot.lane.b32.xlu0 %v626, 32
    %v631 = vpop.permute.xlu0 %630
    %632 = vrot.lane.b32.xlu0 %v627, 32
    %v633 = vpop.permute.xlu0 %632
    %636 = vst.msk [vmem:[#allocation2 + $0x60] sm:$0xff] %vm98, %v631
    %637 = vst.msk [vmem:[#allocation2 + $0x68] sm:$0xff] %vm98, %v633
    %s638 = scalar_lea.vmem [#allocation5], 112
    %v639 = vld [vmem:[%s638] sm:$0xff]
    %v640 = vld [vmem:[%s638 + $0x8] sm:$0xff]
    %v641 = vpack.c.bf16 %v627, %v626
    %643 = vrot.lane.b32.xlu0 %v641, 32
    %v644 = vpop.permute.xlu0 %643
    %v646 = vsel %vm98, %v644, 0
    %648 = vmatpush.bf16.msra.mxu0 0
    %649 = vmatpush.bf16.msra.mxu0 0
    %650 = vmatpush.bf16.msra.mxu0 0
    %651 = vmatpush.bf16.msra.mxu0 0
    %652 = vmatpush.bf16.msra.mxu0 0
    %653 = vmatpush.bf16.msra.mxu0 0
    %654 = vmatpush.bf16.msra.mxu0 %v95
    %655 = vmatpush.bf16.msra.mxu0 %v94
    %656 = vmatmul.bf16.gmra.mxu0 %v646
    %v657 = vpop.f32.mrf.mxu0
    %v658 = vadd.f32 0.0, %v657
    %v659 = vpop.f32.mrf.mxu0
    %v660 = vadd.f32 0.0, %v659
    %661 = vdwg.mxu0
    %v662 = vadd.f32 %v639, %v658
    %v663 = vadd.f32 %v640, %v660
    %v664 = vmul.f32 %v662, %v78
    %v665 = vmul.f32 %v663, %v78
    %v666 = vtanh.pop %v664
    %v667 = vtanh.pop %v665
    %v668 = vmul.f32 %v666, %v78
    %v669 = vmul.f32 %v667, %v78
    %v670 = vadd.f32 %v668, %v79
    %v671 = vadd.f32 %v669, %v79
    %v672 = vmul.f32 %v670, %v614
    %v673 = vmul.f32 %v671, %v615
    %676 = vrot.lane.b32.xlu0 %v670, 64
    %v677 = vpop.permute.xlu0 %676
    %678 = vrot.lane.b32.xlu0 %v671, 64
    %v679 = vpop.permute.xlu0 %678
    %v682 = vmul.f32 %v670, %v677
    %v683 = vmul.f32 %v671, %v679
    %686 = vrot.lane.b32.xlu0 %v682, 32
    %v687 = vpop.permute.xlu0 %686
    %688 = vrot.lane.b32.xlu0 %v683, 32
    %v689 = vpop.permute.xlu0 %688
    %v692 = vadd.f32 %v672, %v687
    %v693 = vadd.f32 %v673, %v689
    %v694 = vtanh.pop %v692
    %v695 = vtanh.pop %v693
    %698 = vrot.lane.b32.xlu0 %v694, 64
    %v699 = vpop.permute.xlu0 %698
    %700 = vrot.lane.b32.xlu0 %v695, 64
    %v701 = vpop.permute.xlu0 %700
    %v704 = vmul.f32 %v670, %v699
    %v705 = vmul.f32 %v671, %v701
    %708 = vrot.lane.b32.xlu0 %v704, 32
    %v709 = vpop.permute.xlu0 %708
    %710 = vrot.lane.b32.xlu0 %v705, 32
    %v711 = vpop.permute.xlu0 %710
    %714 = vst.msk [vmem:[#allocation2 + $0x70] sm:$0xff] %vm98, %v709
    %715 = vst.msk [vmem:[#allocation2 + $0x78] sm:$0xff] %vm98, %v711
    %v716 = vld [vmem:[#allocation2] sm:$0xff]
    %v717 = vld [vmem:[#allocation2 + $0x8] sm:$0xff]
    %v718 = vld [vmem:[#allocation2 + $0x10] sm:$0xff]
    %v719 = vld [vmem:[#allocation2 + $0x18] sm:$0xff]
    %v720 = vld [vmem:[#allocation2 + $0x20] sm:$0xff]
    %v721 = vld [vmem:[#allocation2 + $0x28] sm:$0xff]
    %v722 = vld [vmem:[#allocation2 + $0x30] sm:$0xff]
    %v723 = vld [vmem:[#allocation2 + $0x38] sm:$0xff]
    %v724 = vld [vmem:[#allocation2 + $0x40] sm:$0xff]
    %v725 = vld [vmem:[#allocation2 + $0x48] sm:$0xff]
    %v726 = vld [vmem:[#allocation2 + $0x50] sm:$0xff]
    %v727 = vld [vmem:[#allocation2 + $0x58] sm:$0xff]
    %v728 = vld [vmem:[#allocation2 + $0x60] sm:$0xff]
    %v729 = vld [vmem:[#allocation2 + $0x68] sm:$0xff]
    %v730 = vld [vmem:[#allocation2 + $0x70] sm:$0xff]
    %v731 = vld [vmem:[#allocation2 + $0x78] sm:$0xff]
    %v732 = vpack.c.bf16 %v717, %v716
    %v733 = vpack.c.bf16 %v719, %v718
    %v734 = vpack.c.bf16 %v721, %v720
    %v735 = vpack.c.bf16 %v723, %v722
    %v736 = vpack.c.bf16 %v725, %v724
    %v737 = vpack.c.bf16 %v727, %v726
    %v738 = vpack.c.bf16 %v729, %v728
    %v739 = vpack.c.bf16 %v731, %v730
    %v740 = vld [vmem:[#allocation7] sm:$0xf]
    %v741 = vld [vmem:[#allocation7 + $0x4] sm:$0xf]
    %v742 = vld [vmem:[#allocation7 + $0x8] sm:$0xf]
    %v743 = vld [vmem:[#allocation7 + $0xc] sm:$0xf]
    %v744 = vld [vmem:[%s3] sm:$0x1]
    %v746 = vperm.slane %v744, 0
    %v752 = vunpack.c.l.b16 %v740
    %v753 = vunpack.c.l.b16 %v741
    %v754 = vunpack.c.l.b16 %v742
    %v755 = vunpack.c.l.b16 %v743
    %v756 = vpack.c.b16 %v753, %v752
    %v757 = vpack.c.b16 %v755, %v754
    %v761 = vsel %vm98, %v732, 0
    %v764 = vsel %vm98, %v733, 0
    %v767 = vsel %vm98, %v734, 0
    %v770 = vsel %vm98, %v735, 0
    %v773 = vsel %vm98, %v736, 0
    %v776 = vsel %vm98, %v737, 0
    %v779 = vsel %vm98, %v738, 0
    %v782 = vsel %vm98, %v739, 0
    %784 = vmatpush.bf16.msra.mxu0 0
    %785 = vmatpush.bf16.msra.mxu0 0
    %786 = vmatpush.bf16.msra.mxu0 0
    %787 = vmatpush.bf16.msra.mxu0 0
    %788 = vmatpush.bf16.msra.mxu0 0
    %789 = vmatpush.bf16.msra.mxu0 0
    %790 = vmatpush.bf16.msra.mxu0 %v757
    %791 = vmatpush.bf16.msra.mxu0 %v756
    %792 = vmatmul.bf16.gmra.mxu0 %v761
    %v793 = vpop.f32.mrf.mxu0
    %v794 = vadd.f32 %v746, %v793
    %v795 = vpop.f32.mrf.mxu0
    %v796 = vadd.f32 %v746, %v795
    %797 = vmatmul.bf16.gmra.mxu0 %v764
    %v798 = vpop.f32.mrf.mxu0
    %v799 = vadd.f32 %v746, %v798
    %v800 = vpop.f32.mrf.mxu0
    %v801 = vadd.f32 %v746, %v800
    %802 = vmatmul.bf16.gmra.mxu0 %v767
    %v803 = vpop.f32.mrf.mxu0
    %v804 = vadd.f32 %v746, %v803
    %v805 = vpop.f32.mrf.mxu0
    %v806 = vadd.f32 %v746, %v805
    %807 = vmatmul.bf16.gmra.mxu0 %v770
    %v808 = vpop.f32.mrf.mxu0
    %v809 = vadd.f32 %v746, %v808
    %v810 = vpop.f32.mrf.mxu0
    %v811 = vadd.f32 %v746, %v810
    %812 = vmatmul.bf16.gmra.mxu0 %v773
    %v813 = vpop.f32.mrf.mxu0
    %v814 = vadd.f32 %v746, %v813
    %v815 = vpop.f32.mrf.mxu0
    %v816 = vadd.f32 %v746, %v815
    %817 = vmatmul.bf16.gmra.mxu0 %v776
    %v818 = vpop.f32.mrf.mxu0
    %v819 = vadd.f32 %v746, %v818
    %v820 = vpop.f32.mrf.mxu0
    %v821 = vadd.f32 %v746, %v820
    %822 = vmatmul.bf16.gmra.mxu0 %v779
    %v823 = vpop.f32.mrf.mxu0
    %v824 = vadd.f32 %v746, %v823
    %v825 = vpop.f32.mrf.mxu0
    %v826 = vadd.f32 %v746, %v825
    %827 = vmatmul.bf16.gmra.mxu0 %v782
    %v828 = vpop.f32.mrf.mxu0
    %v829 = vadd.f32 %v746, %v828
    %v830 = vpop.f32.mrf.mxu0
    %v831 = vadd.f32 %v746, %v830
    %832 = vdwg.mxu0
    %833 = vst [vmem:[#allocation3] sm:$0xff] %v794
    %834 = vst [vmem:[#allocation3 + $0x8] sm:$0xff] %v796
    %835 = vst [vmem:[#allocation3 + $0x10] sm:$0xff] %v799
    %836 = vst [vmem:[#allocation3 + $0x18] sm:$0xff] %v801
    %837 = vst [vmem:[#allocation3 + $0x20] sm:$0xff] %v804
    %838 = vst [vmem:[#allocation3 + $0x28] sm:$0xff] %v806
    %839 = vst [vmem:[#allocation3 + $0x30] sm:$0xff] %v809
    %840 = vst [vmem:[#allocation3 + $0x38] sm:$0xff] %v811
    %841 = vst [vmem:[#allocation3 + $0x40] sm:$0xff] %v814
    %842 = vst [vmem:[#allocation3 + $0x48] sm:$0xff] %v816
    %843 = vst [vmem:[#allocation3 + $0x50] sm:$0xff] %v819
    %844 = vst [vmem:[#allocation3 + $0x58] sm:$0xff] %v821
    %845 = vst [vmem:[#allocation3 + $0x60] sm:$0xff] %v824
    %846 = vst [vmem:[#allocation3 + $0x68] sm:$0xff] %v826
    %847 = vst [vmem:[#allocation3 + $0x70] sm:$0xff] %v829
    %848 = vst [vmem:[#allocation3 + $0x78] sm:$0xff] %v831
    %s849 = scalar_lea.vmem [#allocation9], 16
    %v850 = vld [vmem:[%s849] sm:$0xf]
    %v851 = vld [vmem:[%s849 + $0x4] sm:$0xf]
    %v852 = vld [vmem:[%s849 + $0x8] sm:$0xf]
    %v853 = vld [vmem:[%s849 + $0xc] sm:$0xf]
    %v854 = vld [vmem:[#allocation3] sm:$0xff]
    %v855 = vld [vmem:[#allocation3 + $0x8] sm:$0xff]
    %v860 = vunpack.c.l.b16 %v850
    %v861 = vunpack.c.l.b16 %v851
    %v862 = vunpack.c.l.b16 %v852
    %v863 = vunpack.c.l.b16 %v853
    %v864 = vpack.c.b16 %v861, %v860
    %v865 = vpack.c.b16 %v863, %v862
    %868 = vmatpush.bf16.msra.mxu0 0
    %869 = vmatpush.bf16.msra.mxu0 0
    %870 = vmatpush.bf16.msra.mxu0 0
    %871 = vmatpush.bf16.msra.mxu0 0
    %872 = vmatpush.bf16.msra.mxu0 0
    %873 = vmatpush.bf16.msra.mxu0 0
    %874 = vmatpush.bf16.msra.mxu0 %v865
    %875 = vmatpush.bf16.msra.mxu0 %v864
    %876 = vmatmul.bf16.gmra.mxu0 %v100
    %v877 = vpop.f32.mrf.mxu0
    %v878 = vadd.f32 0.0, %v877
    %v879 = vpop.f32.mrf.mxu0
    %v880 = vadd.f32 0.0, %v879
    %881 = vdwg.mxu0
    %v882 = vadd.f32 %v854, %v878
    %v883 = vadd.f32 %v855, %v880
    %v884 = vmul.f32 %v882, %v78
    %v885 = vmul.f32 %v883, %v78
    %v886 = vtanh.pop %v884
    %v887 = vtanh.pop %v885
    %v888 = vmul.f32 %v886, %v78
    %v889 = vmul.f32 %v887, %v78
    %v890 = vadd.f32 %v888, %v79
    %v891 = vadd.f32 %v889, %v79
    %v892 = vmul.f32 %v890, 0.0
    %v893 = vmul.f32 %v891, 0.0
    %896 = vrot.lane.b32.xlu0 %v890, 64
    %v897 = vpop.permute.xlu0 %896
    %898 = vrot.lane.b32.xlu0 %v891, 64
    %v899 = vpop.permute.xlu0 %898
    %v902 = vmul.f32 %v890, %v897
    %v903 = vmul.f32 %v891, %v899
    %906 = vrot.lane.b32.xlu0 %v902, 32
    %v907 = vpop.permute.xlu0 %906
    %908 = vrot.lane.b32.xlu0 %v903, 32
    %v909 = vpop.permute.xlu0 %908
    %v912 = vadd.f32 %v892, %v907
    %v913 = vadd.f32 %v893, %v909
    %v914 = vtanh.pop %v912
    %v915 = vtanh.pop %v913
    %918 = vrot.lane.b32.xlu0 %v914, 64
    %v919 = vpop.permute.xlu0 %918
    %920 = vrot.lane.b32.xlu0 %v915, 64
    %v921 = vpop.permute.xlu0 %920
    %v924 = vmul.f32 %v890, %v919
    %v925 = vmul.f32 %v891, %v921
    %928 = vrot.lane.b32.xlu0 %v924, 32
    %v929 = vpop.permute.xlu0 %928
    %930 = vrot.lane.b32.xlu0 %v925, 32
    %v931 = vpop.permute.xlu0 %930
    %934 = vst.msk [vmem:[#allocation2] sm:$0xff] %vm98, %v929
    %935 = vst.msk [vmem:[#allocation2 + $0x8] sm:$0xff] %vm98, %v931
    %v936 = vld [vmem:[#allocation3 + $0x10] sm:$0xff]
    %v937 = vld [vmem:[#allocation3 + $0x18] sm:$0xff]
    %v938 = vpack.c.bf16 %v925, %v924
    %940 = vrot.lane.b32.xlu0 %v938, 32
    %v941 = vpop.permute.xlu0 %940
    %v943 = vsel %vm98, %v941, 0
    %945 = vmatpush.bf16.msra.mxu0 0
    %946 = vmatpush.bf16.msra.mxu0 0
    %947 = vmatpush.bf16.msra.mxu0 0
    %948 = vmatpush.bf16.msra.mxu0 0
    %949 = vmatpush.bf16.msra.mxu0 0
    %950 = vmatpush.bf16.msra.mxu0 0
    %951 = vmatpush.bf16.msra.mxu0 %v865
    %952 = vmatpush.bf16.msra.mxu0 %v864
    %953 = vmatmul.bf16.gmra.mxu0 %v943
    %v954 = vpop.f32.mrf.mxu0
    %v955 = vadd.f32 0.0, %v954
    %v956 = vpop.f32.mrf.mxu0
    %v957 = vadd.f32 0.0, %v956
    %958 = vdwg.mxu0
    %v959 = vadd.f32 %v936, %v955
    %v960 = vadd.f32 %v937, %v957
    %v961 = vmul.f32 %v959, %v78
    %v962 = vmul.f32 %v960, %v78
    %v963 = vtanh.pop %v961
    %v964 = vtanh.pop %v962
    %v965 = vmul.f32 %v963, %v78
    %v966 = vmul.f32 %v964, %v78
    %v967 = vadd.f32 %v965, %v79
    %v968 = vadd.f32 %v966, %v79
    %v969 = vmul.f32 %v967, %v912
    %v970 = vmul.f32 %v968, %v913
    %973 = vrot.lane.b32.xlu0 %v967, 64
    %v974 = vpop.permute.xlu0 %973
    %975 = vrot.lane.b32.xlu0 %v968, 64
    %v976 = vpop.permute.xlu0 %975
    %v979 = vmul.f32 %v967, %v974
    %v980 = vmul.f32 %v968, %v976
    %983 = vrot.lane.b32.xlu0 %v979, 32
    %v984 = vpop.permute.xlu0 %983
    %985 = vrot.lane.b32.xlu0 %v980, 32
    %v986 = vpop.permute.xlu0 %985
    %v989 = vadd.f32 %v969, %v984
    %v990 = vadd.f32 %v970, %v986
    %v991 = vtanh.pop %v989
    %v992 = vtanh.pop %v990
    %995 = vrot.lane.b32.xlu0 %v991, 64
    %v996 = vpop.permute.xlu0 %995
    %997 = vrot.lane.b32.xlu0 %v992, 64
    %v998 = vpop.permute.xlu0 %997
    %v1001 = vmul.f32 %v967, %v996
    %v1002 = vmul.f32 %v968, %v998
    %1005 = vrot.lane.b32.xlu0 %v1001, 32
    %v1006 = vpop.permute.xlu0 %1005
    %1007 = vrot.lane.b32.xlu0 %v1002, 32
    %v1008 = vpop.permute.xlu0 %1007
    %1011 = vst.msk [vmem:[#allocation2 + $0x10] sm:$0xff] %vm98, %v1006
    %1012 = vst.msk [vmem:[#allocation2 + $0x18] sm:$0xff] %vm98, %v1008
    %v1013 = vld [vmem:[#allocation3 + $0x20] sm:$0xff]
    %v1014 = vld [vmem:[#allocation3 + $0x28] sm:$0xff]
    %v1015 = vpack.c.bf16 %v1002, %v1001
    %1017 = vrot.lane.b32.xlu0 %v1015, 32
    %v1018 = vpop.permute.xlu0 %1017
    %v1020 = vsel %vm98, %v1018, 0
    %1022 = vmatpush.bf16.msra.mxu0 0
    %1023 = vmatpush.bf16.msra.mxu0 0
    %1024 = vmatpush.bf16.msra.mxu0 0
    %1025 = vmatpush.bf16.msra.mxu0 0
    %1026 = vmatpush.bf16.msra.mxu0 0
    %1027 = vmatpush.bf16.msra.mxu0 0
    %1028 = vmatpush.bf16.msra.mxu0 %v865
    %1029 = vmatpush.bf16.msra.mxu0 %v864
    %1030 = vmatmul.bf16.gmra.mxu0 %v1020
    %v1031 = vpop.f32.mrf.mxu0
    %v1032 = vadd.f32 0.0, %v1031
    %v1033 = vpop.f32.mrf.mxu0
    %v1034 = vadd.f32 0.0, %v1033
    %1035 = vdwg.mxu0
    %v1036 = vadd.f32 %v1013, %v1032
    %v1037 = vadd.f32 %v1014, %v1034
    %v1038 = vmul.f32 %v1036, %v78
    %v1039 = vmul.f32 %v1037, %v78
    %v1040 = vtanh.pop %v1038
    %v1041 = vtanh.pop %v1039
    %v1042 = vmul.f32 %v1040, %v78
    %v1043 = vmul.f32 %v1041, %v78
    %v1044 = vadd.f32 %v1042, %v79
    %v1045 = vadd.f32 %v1043, %v79
    %v1046 = vmul.f32 %v1044, %v989
    %v1047 = vmul.f32 %v1045, %v990
    %1050 = vrot.lane.b32.xlu0 %v1044, 64
    %v1051 = vpop.permute.xlu0 %1050
    %1052 = vrot.lane.b32.xlu0 %v1045, 64
    %v1053 = vpop.permute.xlu0 %1052
    %v1056 = vmul.f32 %v1044, %v1051
    %v1057 = vmul.f32 %v1045, %v1053
    %1060 = vrot.lane.b32.xlu0 %v1056, 32
    %v1061 = vpop.permute.xlu0 %1060
    %1062 = vrot.lane.b32.xlu0 %v1057, 32
    %v1063 = vpop.permute.xlu0 %1062
    %v1066 = vadd.f32 %v1046, %v1061
    %v1067 = vadd.f32 %v1047, %v1063
    %v1068 = vtanh.pop %v1066
    %v1069 = vtanh.pop %v1067
    %1072 = vrot.lane.b32.xlu0 %v1068, 64
    %v1073 = vpop.permute.xlu0 %1072
    %1074 = vrot.lane.b32.xlu0 %v1069, 64
    %v1075 = vpop.permute.xlu0 %1074
    %v1078 = vmul.f32 %v1044, %v1073
    %v1079 = vmul.f32 %v1045, %v1075
    %1082 = vrot.lane.b32.xlu0 %v1078, 32
    %v1083 = vpop.permute.xlu0 %1082
    %1084 = vrot.lane.b32.xlu0 %v1079, 32
    %v1085 = vpop.permute.xlu0 %1084
    %1088 = vst.msk [vmem:[#allocation2 + $0x20] sm:$0xff] %vm98, %v1083
    %1089 = vst.msk [vmem:[#allocation2 + $0x28] sm:$0xff] %vm98, %v1085
    %v1090 = vld [vmem:[#allocation3 + $0x30] sm:$0xff]
    %v1091 = vld [vmem:[#allocation3 + $0x38] sm:$0xff]
    %v1092 = vpack.c.bf16 %v1079, %v1078
    %1094 = vrot.lane.b32.xlu0 %v1092, 32
    %v1095 = vpop.permute.xlu0 %1094
    %v1097 = vsel %vm98, %v1095, 0
    %1099 = vmatpush.bf16.msra.mxu0 0
    %1100 = vmatpush.bf16.msra.mxu0 0
    %1101 = vmatpush.bf16.msra.mxu0 0
    %1102 = vmatpush.bf16.msra.mxu0 0
    %1103 = vmatpush.bf16.msra.mxu0 0
    %1104 = vmatpush.bf16.msra.mxu0 0
    %1105 = vmatpush.bf16.msra.mxu0 %v865
    %1106 = vmatpush.bf16.msra.mxu0 %v864
    %1107 = vmatmul.bf16.gmra.mxu0 %v1097
    %v1108 = vpop.f32.mrf.mxu0
    %v1109 = vadd.f32 0.0, %v1108
    %v1110 = vpop.f32.mrf.mxu0
    %v1111 = vadd.f32 0.0, %v1110
    %1112 = vdwg.mxu0
    %v1113 = vadd.f32 %v1090, %v1109
    %v1114 = vadd.f32 %v1091, %v1111
    %v1115 = vmul.f32 %v1113, %v78
    %v1116 = vmul.f32 %v1114, %v78
    %v1117 = vtanh.pop %v1115
    %v1118 = vtanh.pop %v1116
    %v1119 = vmul.f32 %v1117, %v78
    %v1120 = vmul.f32 %v1118, %v78
    %v1121 = vadd.f32 %v1119, %v79
    %v1122 = vadd.f32 %v1120, %v79
    %v1123 = vmul.f32 %v1121, %v1066
    %v1124 = vmul.f32 %v1122, %v1067
    %1127 = vrot.lane.b32.xlu0 %v1121, 64
    %v1128 = vpop.permute.xlu0 %1127
    %1129 = vrot.lane.b32.xlu0 %v1122, 64
    %v1130 = vpop.permute.xlu0 %1129
    %v1133 = vmul.f32 %v1121, %v1128
    %v1134 = vmul.f32 %v1122, %v1130
    %1137 = vrot.lane.b32.xlu0 %v1133, 32
    %v1138 = vpop.permute.xlu0 %1137
    %1139 = vrot.lane.b32.xlu0 %v1134, 32
    %v1140 = vpop.permute.xlu0 %1139
    %v1143 = vadd.f32 %v1123, %v1138
    %v1144 = vadd.f32 %v1124, %v1140
    %v1145 = vtanh.pop %v1143
    %v1146 = vtanh.pop %v1144
    %1149 = vrot.lane.b32.xlu0 %v1145, 64
    %v1150 = vpop.permute.xlu0 %1149
    %1151 = vrot.lane.b32.xlu0 %v1146, 64
    %v1152 = vpop.permute.xlu0 %1151
    %v1155 = vmul.f32 %v1121, %v1150
    %v1156 = vmul.f32 %v1122, %v1152
    %1159 = vrot.lane.b32.xlu0 %v1155, 32
    %v1160 = vpop.permute.xlu0 %1159
    %1161 = vrot.lane.b32.xlu0 %v1156, 32
    %v1162 = vpop.permute.xlu0 %1161
    %1165 = vst.msk [vmem:[#allocation2 + $0x30] sm:$0xff] %vm98, %v1160
    %1166 = vst.msk [vmem:[#allocation2 + $0x38] sm:$0xff] %vm98, %v1162
    %v1167 = vld [vmem:[#allocation3 + $0x40] sm:$0xff]
    %v1168 = vld [vmem:[#allocation3 + $0x48] sm:$0xff]
    %v1169 = vpack.c.bf16 %v1156, %v1155
    %1171 = vrot.lane.b32.xlu0 %v1169, 32
    %v1172 = vpop.permute.xlu0 %1171
    %v1174 = vsel %vm98, %v1172, 0
    %1176 = vmatpush.bf16.msra.mxu0 0
    %1177 = vmatpush.bf16.msra.mxu0 0
    %1178 = vmatpush.bf16.msra.mxu0 0
    %1179 = vmatpush.bf16.msra.mxu0 0
    %1180 = vmatpush.bf16.msra.mxu0 0
    %1181 = vmatpush.bf16.msra.mxu0 0
    %1182 = vmatpush.bf16.msra.mxu0 %v865
    %1183 = vmatpush.bf16.msra.mxu0 %v864
    %1184 = vmatmul.bf16.gmra.mxu0 %v1174
    %v1185 = vpop.f32.mrf.mxu0
    %v1186 = vadd.f32 0.0, %v1185
    %v1187 = vpop.f32.mrf.mxu0
    %v1188 = vadd.f32 0.0, %v1187
    %1189 = vdwg.mxu0
    %v1190 = vadd.f32 %v1167, %v1186
    %v1191 = vadd.f32 %v1168, %v1188
    %v1192 = vmul.f32 %v1190, %v78
    %v1193 = vmul.f32 %v1191, %v78
    %v1194 = vtanh.pop %v1192
    %v1195 = vtanh.pop %v1193
    %v1196 = vmul.f32 %v1194, %v78
    %v1197 = vmul.f32 %v1195, %v78
    %v1198 = vadd.f32 %v1196, %v79
    %v1199 = vadd.f32 %v1197, %v79
    %v1200 = vmul.f32 %v1198, %v1143
    %v1201 = vmul.f32 %v1199, %v1144
    %1204 = vrot.lane.b32.xlu0 %v1198, 64
    %v1205 = vpop.permute.xlu0 %1204
    %1206 = vrot.lane.b32.xlu0 %v1199, 64
    %v1207 = vpop.permute.xlu0 %1206
    %v1210 = vmul.f32 %v1198, %v1205
    %v1211 = vmul.f32 %v1199, %v1207
    %1214 = vrot.lane.b32.xlu0 %v1210, 32
    %v1215 = vpop.permute.xlu0 %1214
    %1216 = vrot.lane.b32.xlu0 %v1211, 32
    %v1217 = vpop.permute.xlu0 %1216
    %v1220 = vadd.f32 %v1200, %v1215
    %v1221 = vadd.f32 %v1201, %v1217
    %v1222 = vtanh.pop %v1220
    %v1223 = vtanh.pop %v1221
    %1226 = vrot.lane.b32.xlu0 %v1222, 64
    %v1227 = vpop.permute.xlu0 %1226
    %1228 = vrot.lane.b32.xlu0 %v1223, 64
    %v1229 = vpop.permute.xlu0 %1228
    %v1232 = vmul.f32 %v1198, %v1227
    %v1233 = vmul.f32 %v1199, %v1229
    %1236 = vrot.lane.b32.xlu0 %v1232, 32
    %v1237 = vpop.permute.xlu0 %1236
    %1238 = vrot.lane.b32.xlu0 %v1233, 32
    %v1239 = vpop.permute.xlu0 %1238
    %1242 = vst.msk [vmem:[#allocation2 + $0x40] sm:$0xff] %vm98, %v1237
    %1243 = vst.msk [vmem:[#allocation2 + $0x48] sm:$0xff] %vm98, %v1239
    %v1244 = vld [vmem:[#allocation3 + $0x50] sm:$0xff]
    %v1245 = vld [vmem:[#allocation3 + $0x58] sm:$0xff]
    %v1246 = vpack.c.bf16 %v1233, %v1232
    %1248 = vrot.lane.b32.xlu0 %v1246, 32
    %v1249 = vpop.permute.xlu0 %1248
    %v1251 = vsel %vm98, %v1249, 0
    %1253 = vmatpush.bf16.msra.mxu0 0
    %1254 = vmatpush.bf16.msra.mxu0 0
    %1255 = vmatpush.bf16.msra.mxu0 0
    %1256 = vmatpush.bf16.msra.mxu0 0
    %1257 = vmatpush.bf16.msra.mxu0 0
    %1258 = vmatpush.bf16.msra.mxu0 0
    %1259 = vmatpush.bf16.msra.mxu0 %v865
    %1260 = vmatpush.bf16.msra.mxu0 %v864
    %1261 = vmatmul.bf16.gmra.mxu0 %v1251
    %v1262 = vpop.f32.mrf.mxu0
    %v1263 = vadd.f32 0.0, %v1262
    %v1264 = vpop.f32.mrf.mxu0
    %v1265 = vadd.f32 0.0, %v1264
    %1266 = vdwg.mxu0
    %v1267 = vadd.f32 %v1244, %v1263
    %v1268 = vadd.f32 %v1245, %v1265
    %v1269 = vmul.f32 %v1267, %v78
    %v1270 = vmul.f32 %v1268, %v78
    %v1271 = vtanh.pop %v1269
    %v1272 = vtanh.pop %v1270
    %v1273 = vmul.f32 %v1271, %v78
    %v1274 = vmul.f32 %v1272, %v78
    %v1275 = vadd.f32 %v1273, %v79
    %v1276 = vadd.f32 %v1274, %v79
    %v1277 = vmul.f32 %v1275, %v1220
    %v1278 = vmul.f32 %v1276, %v1221
    %1281 = vrot.lane.b32.xlu0 %v1275, 64
    %v1282 = vpop.permute.xlu0 %1281
    %1283 = vrot.lane.b32.xlu0 %v1276, 64
    %v1284 = vpop.permute.xlu0 %1283
    %v1287 = vmul.f32 %v1275, %v1282
    %v1288 = vmul.f32 %v1276, %v1284
    %1291 = vrot.lane.b32.xlu0 %v1287, 32
    %v1292 = vpop.permute.xlu0 %1291
    %1293 = vrot.lane.b32.xlu0 %v1288, 32
    %v1294 = vpop.permute.xlu0 %1293
    %v1297 = vadd.f32 %v1277, %v1292
    %v1298 = vadd.f32 %v1278, %v1294
    %v1299 = vtanh.pop %v1297
    %v1300 = vtanh.pop %v1298
    %1303 = vrot.lane.b32.xlu0 %v1299, 64
    %v1304 = vpop.permute.xlu0 %1303
    %1305 = vrot.lane.b32.xlu0 %v1300, 64
    %v1306 = vpop.permute.xlu0 %1305
    %v1309 = vmul.f32 %v1275, %v1304
    %v1310 = vmul.f32 %v1276, %v1306
    %1313 = vrot.lane.b32.xlu0 %v1309, 32
    %v1314 = vpop.permute.xlu0 %1313
    %1315 = vrot.lane.b32.xlu0 %v1310, 32
    %v1316 = vpop.permute.xlu0 %1315
    %1319 = vst.msk [vmem:[#allocation2 + $0x50] sm:$0xff] %vm98, %v1314
    %1320 = vst.msk [vmem:[#allocation2 + $0x58] sm:$0xff] %vm98, %v1316
    %v1321 = vld [vmem:[#allocation3 + $0x60] sm:$0xff]
    %v1322 = vld [vmem:[#allocation3 + $0x68] sm:$0xff]
    %v1323 = vpack.c.bf16 %v1310, %v1309
    %1325 = vrot.lane.b32.xlu0 %v1323, 32
    %v1326 = vpop.permute.xlu0 %1325
    %v1328 = vsel %vm98, %v1326, 0
    %1330 = vmatpush.bf16.msra.mxu0 0
    %1331 = vmatpush.bf16.msra.mxu0 0
    %1332 = vmatpush.bf16.msra.mxu0 0
    %1333 = vmatpush.bf16.msra.mxu0 0
    %1334 = vmatpush.bf16.msra.mxu0 0
    %1335 = vmatpush.bf16.msra.mxu0 0
    %1336 = vmatpush.bf16.msra.mxu0 %v865
    %1337 = vmatpush.bf16.msra.mxu0 %v864
    %1338 = vmatmul.bf16.gmra.mxu0 %v1328
    %v1339 = vpop.f32.mrf.mxu0
    %v1340 = vadd.f32 0.0, %v1339
    %v1341 = vpop.f32.mrf.mxu0
    %v1342 = vadd.f32 0.0, %v1341
    %1343 = vdwg.mxu0
    %v1344 = vadd.f32 %v1321, %v1340
    %v1345 = vadd.f32 %v1322, %v1342
    %v1346 = vmul.f32 %v1344, %v78
    %v1347 = vmul.f32 %v1345, %v78
    %v1348 = vtanh.pop %v1346
    %v1349 = vtanh.pop %v1347
    %v1350 = vmul.f32 %v1348, %v78
    %v1351 = vmul.f32 %v1349, %v78
    %v1352 = vadd.f32 %v1350, %v79
    %v1353 = vadd.f32 %v1351, %v79
    %v1354 = vmul.f32 %v1352, %v1297
    %v1355 = vmul.f32 %v1353, %v1298
    %1358 = vrot.lane.b32.xlu0 %v1352, 64
    %v1359 = vpop.permute.xlu0 %1358
    %1360 = vrot.lane.b32.xlu0 %v1353, 64
    %v1361 = vpop.permute.xlu0 %1360
    %v1364 = vmul.f32 %v1352, %v1359
    %v1365 = vmul.f32 %v1353, %v1361
    %1368 = vrot.lane.b32.xlu0 %v1364, 32
    %v1369 = vpop.permute.xlu0 %1368
    %1370 = vrot.lane.b32.xlu0 %v1365, 32
    %v1371 = vpop.permute.xlu0 %1370
    %v1374 = vadd.f32 %v1354, %v1369
    %v1375 = vadd.f32 %v1355, %v1371
    %v1376 = vtanh.pop %v1374
    %v1377 = vtanh.pop %v1375
    %1380 = vrot.lane.b32.xlu0 %v1376, 64
    %v1381 = vpop.permute.xlu0 %1380
    %1382 = vrot.lane.b32.xlu0 %v1377, 64
    %v1383 = vpop.permute.xlu0 %1382
    %v1386 = vmul.f32 %v1352, %v1381
    %v1387 = vmul.f32 %v1353, %v1383
    %1390 = vrot.lane.b32.xlu0 %v1386, 32
    %v1391 = vpop.permute.xlu0 %1390
    %1392 = vrot.lane.b32.xlu0 %v1387, 32
    %v1393 = vpop.permute.xlu0 %1392
    %1396 = vst.msk [vmem:[#allocation2 + $0x60] sm:$0xff] %vm98, %v1391
    %1397 = vst.msk [vmem:[#allocation2 + $0x68] sm:$0xff] %vm98, %v1393
    %v1398 = vld [vmem:[#allocation3 + $0x70] sm:$0xff]
    %v1399 = vld [vmem:[#allocation3 + $0x78] sm:$0xff]
    %v1400 = vpack.c.bf16 %v1387, %v1386
    %1402 = vrot.lane.b32.xlu0 %v1400, 32
    %v1403 = vpop.permute.xlu0 %1402
    %v1405 = vsel %vm98, %v1403, 0
    %1407 = vmatpush.bf16.msra.mxu0 0
    %1408 = vmatpush.bf16.msra.mxu0 0
    %1409 = vmatpush.bf16.msra.mxu0 0
    %1410 = vmatpush.bf16.msra.mxu0 0
    %1411 = vmatpush.bf16.msra.mxu0 0
    %1412 = vmatpush.bf16.msra.mxu0 0
    %1413 = vmatpush.bf16.msra.mxu0 %v865
    %1414 = vmatpush.bf16.msra.mxu0 %v864
    %1415 = vmatmul.bf16.gmra.mxu0 %v1405
    %v1416 = vpop.f32.mrf.mxu0
    %v1417 = vadd.f32 0.0, %v1416
    %v1418 = vpop.f32.mrf.mxu0
    %v1419 = vadd.f32 0.0, %v1418
    %1420 = vdwg.mxu0
    %v1421 = vadd.f32 %v1398, %v1417
    %v1422 = vadd.f32 %v1399, %v1419
    %v1423 = vmul.f32 %v1421, %v78
    %v1424 = vmul.f32 %v1422, %v78
    %v1425 = vtanh.pop %v1423
    %v1426 = vtanh.pop %v1424
    %v1427 = vmul.f32 %v1425, %v78
    %v1428 = vmul.f32 %v1426, %v78
    %v1429 = vadd.f32 %v1427, %v79
    %v1430 = vadd.f32 %v1428, %v79
    %v1431 = vmul.f32 %v1429, %v1374
    %v1432 = vmul.f32 %v1430, %v1375
    %1435 = vrot.lane.b32.xlu0 %v1429, 64
    %v1436 = vpop.permute.xlu0 %1435
    %1437 = vrot.lane.b32.xlu0 %v1430, 64
    %v1438 = vpop.permute.xlu0 %1437
    %v1441 = vmul.f32 %v1429, %v1436
    %v1442 = vmul.f32 %v1430, %v1438
    %1445 = vrot.lane.b32.xlu0 %v1441, 32
    %v1446 = vpop.permute.xlu0 %1445
    %1447 = vrot.lane.b32.xlu0 %v1442, 32
    %v1448 = vpop.permute.xlu0 %1447
    %v1451 = vadd.f32 %v1431, %v1446
    %v1452 = vadd.f32 %v1432, %v1448
    %v1453 = vtanh.pop %v1451
    %v1454 = vtanh.pop %v1452
    %1457 = vrot.lane.b32.xlu0 %v1453, 64
    %v1458 = vpop.permute.xlu0 %1457
    %1459 = vrot.lane.b32.xlu0 %v1454, 64
    %v1460 = vpop.permute.xlu0 %1459
    %v1463 = vmul.f32 %v1429, %v1458
    %v1464 = vmul.f32 %v1430, %v1460
    %1467 = vrot.lane.b32.xlu0 %v1463, 32
    %v1468 = vpop.permute.xlu0 %1467
    %1469 = vrot.lane.b32.xlu0 %v1464, 32
    %v1470 = vpop.permute.xlu0 %1469
    %1473 = vst.msk [vmem:[#allocation2 + $0x70] sm:$0xff] %vm98, %v1468
    %1474 = vst.msk [vmem:[#allocation2 + $0x78] sm:$0xff] %vm98, %v1470
    %v1475 = vld [vmem:[%s4] sm:$0x1]
    %v1476 = vld [vmem:[#allocation2] sm:$0xff]
    %v1477 = vld [vmem:[#allocation2 + $0x8] sm:$0xff]
    %v1478 = vld [vmem:[#allocation2 + $0x10] sm:$0xff]
    %v1479 = vld [vmem:[#allocation2 + $0x18] sm:$0xff]
    %v1480 = vld [vmem:[#allocation2 + $0x20] sm:$0xff]
    %v1481 = vld [vmem:[#allocation2 + $0x28] sm:$0xff]
    %v1482 = vld [vmem:[#allocation2 + $0x30] sm:$0xff]
    %v1483 = vld [vmem:[#allocation2 + $0x38] sm:$0xff]
    %v1484 = vld [vmem:[#allocation2 + $0x40] sm:$0xff]
    %v1485 = vld [vmem:[#allocation2 + $0x48] sm:$0xff]
    %v1486 = vld [vmem:[#allocation2 + $0x50] sm:$0xff]
    %v1487 = vld [vmem:[#allocation2 + $0x58] sm:$0xff]
    %v1488 = vld [vmem:[#allocation2 + $0x60] sm:$0xff]
    %v1489 = vld [vmem:[#allocation2 + $0x68] sm:$0xff]
    %v1490 = vld [vmem:[#allocation2 + $0x70] sm:$0xff]
    %v1491 = vld [vmem:[#allocation2 + $0x78] sm:$0xff]
    %v1493 = vperm.slane %v1475, 0
    %v1495 = vmul.f32 %v1476, %v1493
    %v1496 = vmul.f32 %v1477, %v1493
    %v1497 = vmul.f32 %v1478, %v1493
    %v1498 = vmul.f32 %v1479, %v1493
    %v1499 = vmul.f32 %v1480, %v1493
    %v1500 = vmul.f32 %v1481, %v1493
    %v1501 = vmul.f32 %v1482, %v1493
    %v1502 = vmul.f32 %v1483, %v1493
    %v1503 = vmul.f32 %v1484, %v1493
    %v1504 = vmul.f32 %v1485, %v1493
    %v1505 = vmul.f32 %v1486, %v1493
    %v1506 = vmul.f32 %v1487, %v1493
    %v1507 = vmul.f32 %v1488, %v1493
    %v1508 = vmul.f32 %v1489, %v1493
    %v1509 = vmul.f32 %v1490, %v1493
    %v1510 = vmul.f32 %v1491, %v1493
    %v1511 = vsel %vm98, %v1495, 0.0
    %1512 = vadd.xlane.f32.xlu0 %v1511
    %v1513 = vpop.xlane.xlu0 %1512
    %v1514 = vsel %vm98, %v1496, 0.0
    %1515 = vadd.xlane.f32.xlu0 %v1514
    %v1516 = vpop.xlane.xlu0 %1515
    %v1517 = vsel %vm98, %v1497, 0.0
    %1518 = vadd.xlane.f32.xlu0 %v1517
    %v1519 = vpop.xlane.xlu0 %1518
    %v1520 = vsel %vm98, %v1498, 0.0
    %1521 = vadd.xlane.f32.xlu0 %v1520
    %v1522 = vpop.xlane.xlu0 %1521
    %v1523 = vsel %vm98, %v1499, 0.0
    %1524 = vadd.xlane.f32.xlu0 %v1523
    %v1525 = vpop.xlane.xlu0 %1524
    %v1526 = vsel %vm98, %v1500, 0.0
    %1527 = vadd.xlane.f32.xlu0 %v1526
    %v1528 = vpop.xlane.xlu0 %1527
    %v1529 = vsel %vm98, %v1501, 0.0
    %1530 = vadd.xlane.f32.xlu0 %v1529
    %v1531 = vpop.xlane.xlu0 %1530
    %v1532 = vsel %vm98, %v1502, 0.0
    %1533 = vadd.xlane.f32.xlu0 %v1532
    %v1534 = vpop.xlane.xlu0 %1533
    %v1535 = vsel %vm98, %v1503, 0.0
    %1536 = vadd.xlane.f32.xlu0 %v1535
    %v1537 = vpop.xlane.xlu0 %1536
    %v1538 = vsel %vm98, %v1504, 0.0
    %1539 = vadd.xlane.f32.xlu0 %v1538
    %v1540 = vpop.xlane.xlu0 %1539
    %v1541 = vsel %vm98, %v1505, 0.0
    %1542 = vadd.xlane.f32.xlu0 %v1541
    %v1543 = vpop.xlane.xlu0 %1542
    %v1544 = vsel %vm98, %v1506, 0.0
    %1545 = vadd.xlane.f32.xlu0 %v1544
    %v1546 = vpop.xlane.xlu0 %1545
    %v1547 = vsel %vm98, %v1507, 0.0
    %1548 = vadd.xlane.f32.xlu0 %v1547
    %v1549 = vpop.xlane.xlu0 %1548
    %v1550 = vsel %vm98, %v1508, 0.0
    %1551 = vadd.xlane.f32.xlu0 %v1550
    %v1552 = vpop.xlane.xlu0 %1551
    %v1553 = vsel %vm98, %v1509, 0.0
    %1554 = vadd.xlane.f32.xlu0 %v1553
    %v1555 = vpop.xlane.xlu0 %1554
    %v1556 = vsel %vm98, %v1510, 0.0
    %1557 = vadd.xlane.f32.xlu0 %v1556
    %v1558 = vpop.xlane.xlu0 %1557
    %v1559 = vld [vmem:[#allocation4] sm:$0x1]
    %v1561 = vperm.slane %v1559, 0
    %v1563 = vadd.f32 %v1513, %v1561
    %v1564 = vadd.f32 %v1516, %v1561
    %v1565 = vadd.f32 %v1519, %v1561
    %v1566 = vadd.f32 %v1522, %v1561
    %v1567 = vadd.f32 %v1525, %v1561
    %v1568 = vadd.f32 %v1528, %v1561
    %v1569 = vadd.f32 %v1531, %v1561
    %v1570 = vadd.f32 %v1534, %v1561
    %v1571 = vadd.f32 %v1537, %v1561
    %v1572 = vadd.f32 %v1540, %v1561
    %v1573 = vadd.f32 %v1543, %v1561
    %v1574 = vadd.f32 %v1546, %v1561
    %v1575 = vadd.f32 %v1549, %v1561
    %v1576 = vadd.f32 %v1552, %v1561
    %v1577 = vadd.f32 %v1555, %v1561
    %v1578 = vadd.f32 %v1558, %v1561
    %vm1579 = vcmask 7168
    %1580 = vst.msk [vmem:[%s6] sm:$0xff] %vm1579, %v1563
    %1581 = vst.msk [vmem:[%s6 + $0x8] sm:$0xff] %vm1579, %v1564
    %1582 = vst.msk [vmem:[%s6 + $0x10] sm:$0xff] %vm1579, %v1565
    %1583 = vst.msk [vmem:[%s6 + $0x18] sm:$0xff] %vm1579, %v1566
    %1584 = vst.msk [vmem:[%s6 + $0x20] sm:$0xff] %vm1579, %v1567
    %1585 = vst.msk [vmem:[%s6 + $0x28] sm:$0xff] %vm1579, %v1568
    %1586 = vst.msk [vmem:[%s6 + $0x30] sm:$0xff] %vm1579, %v1569
    %1587 = vst.msk [vmem:[%s6 + $0x38] sm:$0xff] %vm1579, %v1570
    %1588 = vst.msk [vmem:[%s6 + $0x40] sm:$0xff] %vm1579, %v1571
    %1589 = vst.msk [vmem:[%s6 + $0x48] sm:$0xff] %vm1579, %v1572
    %1590 = vst.msk [vmem:[%s6 + $0x50] sm:$0xff] %vm1579, %v1573
    %1591 = vst.msk [vmem:[%s6 + $0x58] sm:$0xff] %vm1579, %v1574
    %1592 = vst.msk [vmem:[%s6 + $0x60] sm:$0xff] %vm1579, %v1575
    %1593 = vst.msk [vmem:[%s6 + $0x68] sm:$0xff] %vm1579, %v1576
    %1594 = vst.msk [vmem:[%s6 + $0x70] sm:$0xff] %vm1579, %v1577
    %1595 = vst.msk [vmem:[%s6 + $0x78] sm:$0xff] %vm1579, %v1578
    // Predicated region
    $region38: #{tpu_custom_call.1} parent=1 // pred_check
      _
    $region39: #{tpu_custom_call.1} parent=1 // pred_check_branch
      %1597 = sbr.rel (0) target = $region41
    $region40: #{tpu_custom_call.1} parent=1 // pred_region
      _
    $region41: #{tpu_custom_call.1} parent=1 // pred_fallthru
      _
    // Predicated region
    $region42: #{tpu_custom_call.1} parent=1 // pred_check
      _
    $region43: #{tpu_custom_call.1} parent=1 // pred_check_branch
      %1599 = sbr.rel (0) target = $region45
    $region44: #{tpu_custom_call.1} parent=1 // pred_region
      _
    $region45: #{tpu_custom_call.1} parent=1 // pred_fallthru
      _
    %1600 = vsyncpa [#allocation6], 1
    %1601 = vsyncpa [#allocation8], 1

</llo_original>
